<compile_context>
chip_gen: v7x
topology: tpu7x:2x2x1
jax: 0.10.0
libtpu: 0.0.40
codegen_flags: <defaults>
</compile_context>

<pallas_src>
import functools
import math

import jax
import jax.numpy as jnp
from jax.experimental import pallas as pl
from jax.experimental.pallas import tpu as pltpu


# --------------------------------------------------------------------------- #
# Stage 1: fused Q / K / V projection (one (D, 3D) matmul, bf16 outputs).
# The 1/sqrt(d_model) attention scale is pre-folded into the Q columns.
# --------------------------------------------------------------------------- #
def qkv_proj_kernel(x_ref, w_ref, b_ref, q_ref, k_ref, v_ref):
    d = q_ref.shape[-1]
    x = x_ref[0].astype(jnp.bfloat16)                                    # (tS, D)
    qkv = jnp.dot(x, w_ref[...], preferred_element_type=jnp.float32)    # (tS, 3D)
    qkv = qkv + b_ref[...]
    q_ref[0] = qkv[:, :d].astype(q_ref.dtype)
    k_ref[0] = qkv[:, d:2 * d].astype(k_ref.dtype)
    v_ref[0] = qkv[:, 2 * d:].astype(v_ref.dtype)


# --------------------------------------------------------------------------- #
# Stage 2: flash attention + residual + LN1 + chunked FFN + residual + LN2.
# --------------------------------------------------------------------------- #
def attn_ffn_kernel(
    x_ref, q_ref, k_ref, v_ref,
    g1_ref, beta1_ref,
    wf1_ref, bf1_ref, wf2_ref, bf2_ref,
    g2_ref, beta2_ref,
    o_ref,
    m_scr, l_scr, acc_scr,
    *, block_h, ffn_unroll,
):
    kv = pl.program_id(2)
    n_kv = pl.num_programs(2)
    tq, d_model = x_ref.shape[1], x_ref.shape[2]
    hidden = wf1_ref.shape[1]

    @pl.when(kv == 0)
    def _init():
        m_scr[...] = jnp.full_like(m_scr, -jnp.inf)
        l_scr[...] = jnp.zeros_like(l_scr)
        acc_scr[...] = jnp.zeros_like(acc_scr)

    # ---- online-softmax attention step over one KV tile -------------------- #
    # TODO(synk): optional attention mask (mask != None path) not implemented.
    q = q_ref[0]                                                        # (tQ, D)  bf16 (pre-scaled)
    k = k_ref[0]                                                        # (tKV, D) bf16
    v = v_ref[0]                                                        # (tKV, D) bf16
    s = jax.lax.dot_general(q, k, (((1,), (1,)), ((), ())),
                            preferred_element_type=jnp.float32)         # (tQ, tKV) f32
    m_prev = m_scr[...]
    m_new = jnp.maximum(m_prev, jnp.max(s, axis=-1, keepdims=True))
    alpha = jnp.exp(m_prev - m_new)
    p = jnp.exp(s - m_new)
    l_scr[...] = alpha * l_scr[...] + jnp.sum(p, axis=-1, keepdims=True)
    acc_scr[...] = alpha * acc_scr[...] + jnp.dot(
        p.astype(jnp.bfloat16), v, preferred_element_type=jnp.float32)
    m_scr[...] = m_new

    # ---- finalize: residual + LN1 + chunked FFN + residual + LN2 ----------- #
    @pl.when(kv == n_kv - 1)
    def _finalize():
        attended = acc_scr[...] * pl.reciprocal(l_scr[...], approx=True)
        x32 = x_ref[0].astype(jnp.float32)
        h = attended + x32

        mu1 = jnp.mean(h, axis=-1, keepdims=True)
        var1 = jnp.mean((h - mu1) ** 2, axis=-1, keepdims=True)
        hn = (h - mu1) * jax.lax.rsqrt(var1 + 1e-5) * g1_ref[...] + beta1_ref[...]
        hn_bf = hn.astype(jnp.bfloat16)

        c = jnp.float32(math.sqrt(2.0 / math.pi))

        def ffn_chunk(hidx, acc):
            off = pl.multiple_of(hidx * block_h, block_h)
            f = jnp.dot(hn_bf, wf1_ref[:, pl.ds(off, block_h)],
                        preferred_element_type=jnp.float32)
            f = f + bf1_ref[:, pl.ds(off, block_h)]
            # NewGELU; f*f*f (VALU) instead of pow().
            g = 0.5 * f * (1.0 + jnp.tanh(c * (f + 0.044715 * (f * f * f))))
            return acc + jnp.dot(g.astype(jnp.bfloat16),
                                 wf2_ref[pl.ds(off, block_h), :],
                                 preferred_element_type=jnp.float32)

        f2 = jax.lax.fori_loop(0, hidden // block_h, ffn_chunk,
                               jnp.zeros((tq, d_model), jnp.float32),
                               unroll=ffn_unroll)
        f2 = f2 + bf2_ref[...]

        # TODO(synk): dropout treated as identity (eval mode).
        h2 = f2 + hn
        mu2 = jnp.mean(h2, axis=-1, keepdims=True)
        var2 = jnp.mean((h2 - mu2) ** 2, axis=-1, keepdims=True)
        out = (h2 - mu2) * jax.lax.rsqrt(var2 + 1e-5) * g2_ref[...] + beta2_ref[...]
        o_ref[0] = out.astype(o_ref.dtype)


# --------------------------------------------------------------------------- #
# Wrapper helpers
# --------------------------------------------------------------------------- #
def _default_block_sizes():
    """Generation-aware tiles: 256 fills the 2x256x256 MXU on v6e/v7x; v5e and
    older have 128-wide MXUs that a 128 tile already saturates."""
    try:
        kind = jax.devices()[0].device_kind.lower()
    except Exception:
        kind = ""
    if ("v6" in kind) or ("v7" in kind):
        return 256, 256, 512
    return 128, 128, 256


def _vmem_limit_bytes(need_bytes):
    """Request generous VMEM but never exceed physical VMEM (v7x has 64 MiB)."""
    try:
        cap = pltpu.get_tpu_info().vmem_capacity_bytes
    except Exception:
        cap = 64 * 1024 * 1024                       # safe on every generation
    ceiling = max(cap - 8 * 1024 * 1024, 24 * 1024 * 1024)
    return int(min(max(int(1.5 * need_bytes), 32 * 1024 * 1024), ceiling))


def transformer_block(x, params, *, block_q=None, block_kv=None, block_h=None):
    B, S, D = x.shape
    H = 4 * D
    if D % 128 != 0:
        raise ValueError("d_model must be a multiple of 128 (lane width).")

    dq, dkv, dh = _default_block_sizes()
    block_q = min(block_q or dq, S)
    block_kv = min(block_kv or dkv, S)
    block_h = min(block_h or dh, H)
    if (S % block_q) or (S % block_kv) or (H % block_h):
        raise ValueError("S must be divisible by block_q/block_kv and 4*D by block_h.")

    bf16 = jnp.bfloat16
    f32 = jnp.float32
    scale = 1.0 / math.sqrt(D)

    # Fold the 1/sqrt(D) attention scale into the Q projection (free), and fuse
    # Q/K/V weights into one (D, 3D) operand so stage 1 is a single wide matmul.
    w_qkv = jnp.concatenate(
        [params["wq"] * scale, params["wk"], params["wv"]], axis=1).astype(bf16)
    b_qkv = jnp.concatenate(
        [params["bq"] * scale, params["bk"], params["bv"]], axis=1).astype(f32)
    wf1 = params["wf1"].astype(bf16)
    wf2 = params["wf2"].astype(bf16)

    n_q = S // block_q
    n_kv = S // block_kv
    n_h = H // block_h
    ffn_unroll = max(1, min(2, n_h))
    itm = x.dtype.itemsize

    # VMEM need estimates (weights single-buffered, K/V triple-buffered).
    stage1_need = (3 * D * D * 2 + 3 * D * 4
                   + 2 * block_q * D * itm + 2 * 3 * block_q * D * 2
                   + block_q * 3 * D * 4)
    stage2_need = (2 * D * H * 2 + (6 * D + H) * 4
                   + 2 * block_q * D * itm * 2      # x in & out tiles (double buffered)
                   + 2 * block_q * D * 2            # Q tile
                   + 3 * 2 * block_kv * D * 2       # K, V tiles (triple buffered)
                   + block_q * D * 4 + 2 * block_q * 4
                   + 4 * block_q * max(block_kv, block_h) * 4)

    # Cost estimate for XLA's scheduler (includes the n_q-fold K/V re-read).
    flops = 4 * B * S * S * D + 4 * B * S * D * H
    cost = pl.CostEstimate(
        flops=int(flops),
        transcendentals=int(B * S * S + B * S * H),
        bytes_accessed=int(itm * 2 * B * S * D          # x in, out
                           + 2 * B * S * D * 2          # Q (bf16) read once
                           + n_q * 2 * 2 * B * S * D    # K, V re-read n_q times (bf16)
                           + 2 * 2 * D * H + (6 * D + H) * 4))

    def run(use_pipeline_mode):
        def spec(shape, index_map, buffers=None):
            if buffers is None or not use_pipeline_mode:
                return pl.BlockSpec(shape, index_map)
            return pl.BlockSpec(shape, index_map, pipeline_mode=pl.Buffered(buffers))

        const2 = lambda b, i: (0, 0)
        const3 = lambda b, i, j: (0, 0)

        # ---- stage 1: fused Q/K/V projection -------------------------------
        q, k, v = pl.pallas_call(
            qkv_proj_kernel,
            out_shape=(jax.ShapeDtypeStruct((B, S, D), bf16),) * 3,
            grid_spec=pltpu.PrefetchScalarGridSpec(
                num_scalar_prefetch=0,
                grid=(B, n_q),
                in_specs=[
                    pl.BlockSpec((1, block_q, D), lambda b, i: (b, i, 0)),
                    spec((D, 3 * D), const2, buffers=1),   # fused QKV weight
                    spec((1, 3 * D), const2, buffers=1),   # fused QKV bias
                ],
                out_specs=[pl.BlockSpec((1, block_q, D), lambda b, i: (b, i, 0))] * 3,
            ),
            compiler_params=pltpu.CompilerParams(
                dimension_semantics=("parallel", "parallel"),
                vmem_limit_bytes=_vmem_limit_bytes(stage1_need)),
        )(x, w_qkv, b_qkv)

        # ---- stage 2: flash attention + LN1 + FFN + LN2 ---------------------
        # NOTE(v7x): B * n_q should be even so both TensorCores get work.
        out = pl.pallas_call(
            functools.partial(attn_ffn_kernel, block_h=block_h,
                              ffn_unroll=ffn_unroll),
            out_shape=jax.ShapeDtypeStruct((B, S, D), x.dtype),
            grid_spec=pltpu.PrefetchScalarGridSpec(
                num_scalar_prefetch=0,
                grid=(B, n_q, n_kv),
                in_specs=[
                    pl.BlockSpec((1, block_q, D), lambda b, i, j: (b, i, 0)),   # x
                    pl.BlockSpec((1, block_q, D), lambda b, i, j: (b, i, 0)),   # Q
                    spec((1, block_kv, D), lambda b, i, j: (b, j, 0), buffers=3),  # K
                    spec((1, block_kv, D), lambda b, i, j: (b, j, 0), buffers=3),  # V
                    spec((1, D), const3, buffers=1), spec((1, D), const3, buffers=1),  # g1, beta1
                    spec((D, H), const3, buffers=1), spec((1, H), const3, buffers=1),  # wf1, bf1
                    spec((H, D), const3, buffers=1), spec((1, D), const3, buffers=1),  # wf2, bf2
                    spec((1, D), const3, buffers=1), spec((1, D), const3, buffers=1),  # g2, beta2
                ],
                out_specs=pl.BlockSpec((1, block_q, D), lambda b, i, j: (b, i, 0)),
                scratch_shapes=[
                    pltpu.VMEM((block_q, 1), jnp.float32),    # running max
                    pltpu.VMEM((block_q, 1), jnp.float32),    # running denom
                    pltpu.VMEM((block_q, D), jnp.float32),    # output accumulator
                ],
            ),
            compiler_params=pltpu.CompilerParams(
                dimension_semantics=("parallel", "parallel", "arbitrary"),
                vmem_limit_bytes=_vmem_limit_bytes(stage2_need)),
            cost_estimate=cost,
        )(x, q, k, v,
          params["g1"], params["beta1"],
          wf1, params["bf1"], wf2, params["bf2"],
          params["g2"], params["beta2"])
        return out

    try:
        return run(True)
    except Exception:
        # pipeline_mode / pl.Buffered unsupported in this JAX build -> default buffering.
        return run(False)


# --------------------------------------------------------------------------- #
# Params / pure-JAX reference
# --------------------------------------------------------------------------- #
def init_params(key, d_model):
    H = 4 * d_model
    ks = jax.random.split(key, 8)
    scale = 0.02

    def lin(k, fan_in, fan_out):
        # stored as (in, out) -> kernel computes x @ W + b
        return scale * jax.random.normal(k, (fan_in, fan_out), jnp.float32)

    return {
        "wq": lin(ks[0], d_model, d_model), "bq": jnp.zeros((1, d_model), jnp.float32),
        "wk": lin(ks[1], d_model, d_model), "bk": jnp.zeros((1, d_model), jnp.float32),
        "wv": lin(ks[2], d_model, d_model), "bv": jnp.zeros((1, d_model), jnp.float32),
        "g1": jnp.ones((1, d_model), jnp.float32),
        "beta1": jnp.zeros((1, d_model), jnp.float32),
        "wf1": lin(ks[3], d_model, H), "bf1": jnp.zeros((1, H), jnp.float32),
        "wf2": lin(ks[4], H, d_model), "bf2": jnp.zeros((1, d_model), jnp.float32),
        "g2": jnp.ones((1, d_model), jnp.float32),
        "beta2": jnp.zeros((1, d_model), jnp.float32),
    }


def reference_block(x, p):
    D = x.shape[-1]
    q = x @ p["wq"] + p["bq"]
    k = x @ p["wk"] + p["bk"]
    v = x @ p["wv"] + p["bv"]
    scores = jnp.einsum("bsd,btd->bst", q, k) / math.sqrt(D)
    attn = jax.nn.softmax(scores, axis=-1)
    attended = jnp.einsum("bst,btd->bsd", attn, v)

    def ln(h, g, b):
        mu = h.mean(-1, keepdims=True)
        var = ((h - mu) ** 2).mean(-1, keepdims=True)
        return (h - mu) * jax.lax.rsqrt(var + 1e-5) * g + b

    hn = ln(attended + x, p["g1"], p["beta1"])
    f = hn @ p["wf1"] + p["bf1"]
    gelu = 0.5 * f * (1.0 + jnp.tanh(math.sqrt(2.0 / math.pi) * (f + 0.044715 * f ** 3)))
    f2 = gelu @ p["wf2"] + p["bf2"]
    return ln(f2 + hn, p["g2"], p["beta2"])


if __name__ == "__main__":
    key = jax.random.PRNGKey(0)
    kx, kp = jax.random.split(key)

    # Small but lane-aligned shapes: D % 128 == 0, S a multiple of the tiles.
    B, S, D = 2, 256, 128
    x = jax.random.normal(kx, (B, S, D), jnp.float32)
    params = init_params(kp, D)

    out = jax.block_until_ready(transformer_block(x, params))
    ref = reference_block(x, params)

    assert out.shape == (B, S, D)
    max_err = float(jnp.max(jnp.abs(out - ref)))
    # bf16 MXU operands with fp32 accumulation -> compare at bf16-level tolerance.
    assert jnp.allclose(out, ref, atol=2e-2, rtol=2e-2), (
        f"mismatch vs reference (max abs err {max_err})")

    print("KERNEL_OK")
</pallas_src>

<mosaic_0001>
module attributes {stable_mosaic.version = 11 : i64} {
  func.func @qkv_proj_kernel(%arg0: i32, %arg1: i32, %arg2: memref<1x128x128xf32, #tpu.memory_space<vmem>>, %arg3: memref<128x384xbf16, #tpu.memory_space<vmem>>, %arg4: memref<1x384xf32, #tpu.memory_space<vmem>>, %arg5: memref<1x128x128xbf16, #tpu.memory_space<vmem>>, %arg6: memref<1x128x128xbf16, #tpu.memory_space<vmem>>, %arg7: memref<1x128x128xbf16, #tpu.memory_space<vmem>>) attributes {dimension_semantics = [#tpu.dimension_semantics<parallel>, #tpu.dimension_semantics<parallel>], iteration_bounds = array<i64: 2, 2>, scalar_prefetch = 0 : i64, scratch_operands = 0 : i64, tpu.core_type = #tpu.core_type<tc>, window_params = [{transform_indices = @transform_0, window_bounds = array<i64: 1, 128, 128>}, {pipeline_mode = #tpu.pipeline_mode<synchronous>, transform_indices = @transform_1, window_bounds = array<i64: 128, 384>}, {pipeline_mode = #tpu.pipeline_mode<synchronous>, transform_indices = @transform_2, window_bounds = array<i64: 1, 384>}, {transform_indices = @transform_3, window_bounds = array<i64: 1, 128, 128>}, {transform_indices = @transform_4, window_bounds = array<i64: 1, 128, 128>}, {transform_indices = @transform_5, window_bounds = array<i64: 1, 128, 128>}]} {
    %c0 = arith.constant 0 : index
    %c0_0 = arith.constant 0 : index
    %c0_1 = arith.constant 0 : index
    %0 = vector.load %arg2[%c0, %c0_0, %c0_1] : memref<1x128x128xf32, #tpu.memory_space<vmem>>, vector<1x128x128xf32>
    %1 = vector.shape_cast %0 : vector<1x128x128xf32> to vector<128x128xf32>
    %2 = arith.truncf %1 : vector<128x128xf32> to vector<128x128xbf16>
    %c0_2 = arith.constant 0 : index
    %c0_3 = arith.constant 0 : index
    %3 = vector.load %arg3[%c0_2, %c0_3] : memref<128x384xbf16, #tpu.memory_space<vmem>>, vector<128x384xbf16>
    %cst = arith.constant dense<0.000000e+00> : vector<128x384xf32>
    %4 = tpu.matmul %2, %3, %cst {dimension_numbers = #tpu.dot_dimension_numbers<[1], [0], [0], [1], [0, 0, 1, 1], [], []>} : vector<128x128xbf16>, vector<128x384xbf16>, vector<128x384xf32> -> vector<128x384xf32>
    %c0_4 = arith.constant 0 : index
    %c0_5 = arith.constant 0 : index
    %5 = vector.load %arg4[%c0_4, %c0_5] : memref<1x384xf32, #tpu.memory_space<vmem>>, vector<1x384xf32>
    %6 = vector.broadcast %5 : vector<1x384xf32> to vector<128x384xf32>
    %7 = arith.addf %4, %6 : vector<128x384xf32>
    %8 = vector.extract_strided_slice %7 {offsets = [0, 0], sizes = [128, 128], strides = [1, 1]} : vector<128x384xf32> to vector<128x128xf32>
    %9 = arith.truncf %8 : vector<128x128xf32> to vector<128x128xbf16>
    %c0_6 = arith.constant 0 : index
    %c0_7 = arith.constant 0 : index
    %c0_8 = arith.constant 0 : index
    %10 = vector.load %arg5[%c0_6, %c0_7, %c0_8] : memref<1x128x128xbf16, #tpu.memory_space<vmem>>, vector<1x128x128xbf16>
    %11 = vector.shape_cast %10 : vector<1x128x128xbf16> to vector<128x128xbf16>
    %12 = vector.shape_cast %9 : vector<128x128xbf16> to vector<1x128x128xbf16>
    tpu.vector_store %arg5[%c0_6, %c0_7, %c0_8], %12 {strides = array<i32>} : memref<1x128x128xbf16, #tpu.memory_space<vmem>>, vector<1x128x128xbf16>,
    %13 = vector.extract_strided_slice %7 {offsets = [0, 128], sizes = [128, 128], strides = [1, 1]} : vector<128x384xf32> to vector<128x128xf32>
    %14 = arith.truncf %13 : vector<128x128xf32> to vector<128x128xbf16>
    %c0_9 = arith.constant 0 : index
    %c0_10 = arith.constant 0 : index
    %c0_11 = arith.constant 0 : index
    %15 = vector.load %arg6[%c0_9, %c0_10, %c0_11] : memref<1x128x128xbf16, #tpu.memory_space<vmem>>, vector<1x128x128xbf16>
    %16 = vector.shape_cast %15 : vector<1x128x128xbf16> to vector<128x128xbf16>
    %17 = vector.shape_cast %14 : vector<128x128xbf16> to vector<1x128x128xbf16>
    tpu.vector_store %arg6[%c0_9, %c0_10, %c0_11], %17 {strides = array<i32>} : memref<1x128x128xbf16, #tpu.memory_space<vmem>>, vector<1x128x128xbf16>,
    %18 = vector.extract_strided_slice %7 {offsets = [0, 256], sizes = [128, 128], strides = [1, 1]} : vector<128x384xf32> to vector<128x128xf32>
    %19 = arith.truncf %18 : vector<128x128xf32> to vector<128x128xbf16>
    %c0_12 = arith.constant 0 : index
    %c0_13 = arith.constant 0 : index
    %c0_14 = arith.constant 0 : index
    %20 = vector.load %arg7[%c0_12, %c0_13, %c0_14] : memref<1x128x128xbf16, #tpu.memory_space<vmem>>, vector<1x128x128xbf16>
    %21 = vector.shape_cast %20 : vector<1x128x128xbf16> to vector<128x128xbf16>
    %22 = vector.shape_cast %19 : vector<128x128xbf16> to vector<1x128x128xbf16>
    tpu.vector_store %arg7[%c0_12, %c0_13, %c0_14], %22 {strides = array<i32>} : memref<1x128x128xbf16, #tpu.memory_space<vmem>>, vector<1x128x128xbf16>,
    return
  }
  func.func @transform_0(%arg0: i32, %arg1: i32) -> (i32, i32, i32) {
    %c0_i32 = arith.constant 0 : i32
    %c0_i32_0 = arith.constant 0 : i32
    return %arg0, %arg1, %c0_i32 : i32, i32, i32
  }
  func.func @transform_1(%arg0: i32, %arg1: i32) -> (i32, i32) {
    %c0_i32 = arith.constant 0 : i32
    %c0_i32_0 = arith.constant 0 : i32
    %c0_i32_1 = arith.constant 0 : i32
    return %c0_i32, %c0_i32_0 : i32, i32
  }
  func.func @transform_2(%arg0: i32, %arg1: i32) -> (i32, i32) {
    %c0_i32 = arith.constant 0 : i32
    %c0_i32_0 = arith.constant 0 : i32
    %c0_i32_1 = arith.constant 0 : i32
    return %c0_i32, %c0_i32_0 : i32, i32
  }
  func.func @transform_3(%arg0: i32, %arg1: i32) -> (i32, i32, i32) {
    %c0_i32 = arith.constant 0 : i32
    %c0_i32_0 = arith.constant 0 : i32
    return %arg0, %arg1, %c0_i32 : i32, i32, i32
  }
  func.func @transform_4(%arg0: i32, %arg1: i32) -> (i32, i32, i32) {
    %c0_i32 = arith.constant 0 : i32
    %c0_i32_0 = arith.constant 0 : i32
    return %arg0, %arg1, %c0_i32 : i32, i32, i32
  }
  func.func @transform_5(%arg0: i32, %arg1: i32) -> (i32, i32, i32) {
    %c0_i32 = arith.constant 0 : i32
    %c0_i32_0 = arith.constant 0 : i32
    return %arg0, %arg1, %c0_i32 : i32, i32, i32
  }
}

module attributes {stable_mosaic.version = 11 : i64} {
  func.func @qkv_proj_kernel(%arg0: i32, %arg1: i32, %arg2: memref<1x128x128xf32, #tpu.memory_space<vmem>>, %arg3: memref<128x384xbf16, #tpu.memory_space<vmem>>, %arg4: memref<1x384xf32, #tpu.memory_space<vmem>>, %arg5: memref<1x128x128xbf16, #tpu.memory_space<vmem>>, %arg6: memref<1x128x128xbf16, #tpu.memory_space<vmem>>, %arg7: memref<1x128x128xbf16, #tpu.memory_space<vmem>>) attributes {dimension_semantics = [#tpu.dimension_semantics<parallel>, #tpu.dimension_semantics<parallel>], iteration_bounds = array<i64: 2, 2>, scalar_prefetch = 0 : i64, scratch_operands = 0 : i64, tpu.core_type = #tpu.core_type<tc>, window_params = [{transform_indices = @transform_0, window_bounds = array<i64: 1, 128, 128>}, {pipeline_mode = #tpu.pipeline_mode<synchronous>, transform_indices = @transform_1, window_bounds = array<i64: 128, 384>}, {pipeline_mode = #tpu.pipeline_mode<synchronous>, transform_indices = @transform_2, window_bounds = array<i64: 1, 384>}, {transform_indices = @transform_3, window_bounds = array<i64: 1, 128, 128>}, {transform_indices = @transform_4, window_bounds = array<i64: 1, 128, 128>}, {transform_indices = @transform_5, window_bounds = array<i64: 1, 128, 128>}]} {
    %c0 = arith.constant 0 : index
    %c0_0 = arith.constant 0 : index
    %c0_1 = arith.constant 0 : index
    %0 = vector.load %arg2[%c0, %c0_0, %c0_1] : memref<1x128x128xf32, #tpu.memory_space<vmem>>, vector<1x128x128xf32>
    %1 = vector.shape_cast %0 : vector<1x128x128xf32> to vector<128x128xf32>
    %2 = arith.truncf %1 : vector<128x128xf32> to vector<128x128xbf16>
    %c0_2 = arith.constant 0 : index
    %c0_3 = arith.constant 0 : index
    %3 = vector.load %arg3[%c0_2, %c0_3] : memref<128x384xbf16, #tpu.memory_space<vmem>>, vector<128x384xbf16>
    %cst = arith.constant dense<0.000000e+00> : vector<128x384xf32>
    %4 = tpu.matmul %2, %3, %cst {dimension_numbers = #tpu.dot_dimension_numbers<[1], [0], [0], [1], [0, 0, 1, 1], [], []>} : vector<128x128xbf16>, vector<128x384xbf16>, vector<128x384xf32> -> vector<128x384xf32>
    %c0_4 = arith.constant 0 : index
    %c0_5 = arith.constant 0 : index
    %5 = vector.load %arg4[%c0_4, %c0_5] : memref<1x384xf32, #tpu.memory_space<vmem>>, vector<1x384xf32>
    %6 = vector.broadcast %5 : vector<1x384xf32> to vector<128x384xf32>
    %7 = arith.addf %4, %6 : vector<128x384xf32>
    %8 = vector.extract_strided_slice %7 {offsets = [0, 0], sizes = [128, 128], strides = [1, 1]} : vector<128x384xf32> to vector<128x128xf32>
    %9 = arith.truncf %8 : vector<128x128xf32> to vector<128x128xbf16>
    %c0_6 = arith.constant 0 : index
    %c0_7 = arith.constant 0 : index
    %c0_8 = arith.constant 0 : index
    %10 = vector.load %arg5[%c0_6, %c0_7, %c0_8] : memref<1x128x128xbf16, #tpu.memory_space<vmem>>, vector<1x128x128xbf16>
    %11 = vector.shape_cast %10 : vector<1x128x128xbf16> to vector<128x128xbf16>
    %12 = vector.shape_cast %9 : vector<128x128xbf16> to vector<1x128x128xbf16>
    tpu.vector_store %arg5[%c0_6, %c0_7, %c0_8], %12 {strides = array<i32>} : memref<1x128x128xbf16, #tpu.memory_space<vmem>>, vector<1x128x128xbf16>,
    %13 = vector.extract_strided_slice %7 {offsets = [0, 128], sizes = [128, 128], strides = [1, 1]} : vector<128x384xf32> to vector<128x128xf32>
    %14 = arith.truncf %13 : vector<128x128xf32> to vector<128x128xbf16>
    %c0_9 = arith.constant 0 : index
    %c0_10 = arith.constant 0 : index
    %c0_11 = arith.constant 0 : index
    %15 = vector.load %arg6[%c0_9, %c0_10, %c0_11] : memref<1x128x128xbf16, #tpu.memory_space<vmem>>, vector<1x128x128xbf16>
    %16 = vector.shape_cast %15 : vector<1x128x128xbf16> to vector<128x128xbf16>
    %17 = vector.shape_cast %14 : vector<128x128xbf16> to vector<1x128x128xbf16>
    tpu.vector_store %arg6[%c0_9, %c0_10, %c0_11], %17 {strides = array<i32>} : memref<1x128x128xbf16, #tpu.memory_space<vmem>>, vector<1x128x128xbf16>,
    %18 = vector.extract_strided_slice %7 {offsets = [0, 256], sizes = [128, 128], strides = [1, 1]} : vector<128x384xf32> to vector<128x128xf32>
    %19 = arith.truncf %18 : vector<128x128xf32> to vector<128x128xbf16>
    %c0_12 = arith.constant 0 : index
    %c0_13 = arith.constant 0 : index
    %c0_14 = arith.constant 0 : index
    %20 = vector.load %arg7[%c0_12, %c0_13, %c0_14] : memref<1x128x128xbf16, #tpu.memory_space<vmem>>, vector<1x128x128xbf16>
    %21 = vector.shape_cast %20 : vector<1x128x128xbf16> to vector<128x128xbf16>
    %22 = vector.shape_cast %19 : vector<128x128xbf16> to vector<1x128x128xbf16>
    tpu.vector_store %arg7[%c0_12, %c0_13, %c0_14], %22 {strides = array<i32>} : memref<1x128x128xbf16, #tpu.memory_space<vmem>>, vector<1x128x128xbf16>,
    return
  }
  func.func @transform_0(%arg0: i32, %arg1: i32) -> (i32, i32, i32) {
    %c0_i32 = arith.constant 0 : i32
    %c0_i32_0 = arith.constant 0 : i32
    return %arg0, %arg1, %c0_i32 : i32, i32, i32
  }
  func.func @transform_1(%arg0: i32, %arg1: i32) -> (i32, i32) {
    %c0_i32 = arith.constant 0 : i32
    %c0_i32_0 = arith.constant 0 : i32
    %c0_i32_1 = arith.constant 0 : i32
    return %c0_i32, %c0_i32_0 : i32, i32
  }
  func.func @transform_2(%arg0: i32, %arg1: i32) -> (i32, i32) {
    %c0_i32 = arith.constant 0 : i32
    %c0_i32_0 = arith.constant 0 : i32
    %c0_i32_1 = arith.constant 0 : i32
    return %c0_i32, %c0_i32_0 : i32, i32
  }
  func.func @transform_3(%arg0: i32, %arg1: i32) -> (i32, i32, i32) {
    %c0_i32 = arith.constant 0 : i32
    %c0_i32_0 = arith.constant 0 : i32
    return %arg0, %arg1, %c0_i32 : i32, i32, i32
  }
  func.func @transform_4(%arg0: i32, %arg1: i32) -> (i32, i32, i32) {
    %c0_i32 = arith.constant 0 : i32
    %c0_i32_0 = arith.constant 0 : i32
    return %arg0, %arg1, %c0_i32 : i32, i32, i32
  }
  func.func @transform_5(%arg0: i32, %arg1: i32) -> (i32, i32, i32) {
    %c0_i32 = arith.constant 0 : i32
    %c0_i32_0 = arith.constant 0 : i32
    return %arg0, %arg1, %c0_i32 : i32, i32, i32
  }
}

</mosaic_0001>

<llo_original>
// kernel: tpu_custom_call.1
$region0: #{tpu_custom_call.1}
  #allocation0 [shape = 'u32[]', space=smem, size = 0x4, offset = 0x4, fixed_abs, tag = 'smem constant byte address 0x4 - core index']
  #allocation1 [shape = 'u32[144,128]{1,0:T(1,128)}', space=vmem, size = 0x12000, scoped, tag = 'internal scratch']
  %s0 = inlined_call_operand.hbm [shape: f32[2,256,128], index: 0, kind: input, shape index: {}]
  %s1 = inlined_call_operand.hbm [shape: bf16[128,384], index: 1, kind: input, shape index: {}]
  %s2 = inlined_call_operand.vmem [shape: f32[1,384], index: 2, kind: input, shape index: {}]
  %s3 = inlined_call_operand.hbm [shape: bf16[2,256,128], index: 3, kind: output, shape index: {0}]
  %s4 = inlined_call_operand.hbm [shape: bf16[2,256,128], index: 4, kind: output, shape index: {1}]
  %s5 = inlined_call_operand.hbm [shape: bf16[2,256,128], index: 5, kind: output, shape index: {2}]
  %6 = xla_tuple %s3, %s4, %s5
  %s7 = sld [smem:[#allocation0]]
  $region69: #{tpu_custom_call.1} parent=0
    _
  %s9 = ssub.s32 1, %s7
  %s10 = scalar_select 0, %s9, %s7
  $region1: #{tpu_custom_call.1} parent=0
    #allocation2 [shape = 'u8[131072]{0}', space=vmem, size = 0x20000, scoped, tag = 'input window, operand 0']
    #allocation3 [shape = 's32[2]{0}', space=sflag, size = 0x8, scoped, tag = 'scoped memory for tpu_custom_call.1']
    #allocation4 [shape = 's32[2]{0}', space=sflag, size = 0x8, scoped, tag = 'scoped memory for tpu_custom_call.1']
    #allocation5 [shape = 'u8[98304]{0}', space=vmem, size = 0x18000, scoped, tag = 'input window, operand 1, single buffered']
    #allocation6 [shape = 's32[1]{0}', space=sflag, size = 0x4, scoped, tag = 'scoped memory for tpu_custom_call.1']
    #allocation7 [shape = 'u8[65536]{0}', space=vmem, size = 0x10000, scoped, tag = 'output window, operand 0']
    #allocation8 [shape = 'u8[65536]{0}', space=vmem, size = 0x10000, scoped, tag = 'output window, operand 1']
    #allocation9 [shape = 's32[2]{0}', space=sflag, size = 0x8, scoped, tag = 'scoped memory for tpu_custom_call.1']
    #allocation10 [shape = 'u8[65536]{0}', space=vmem, size = 0x10000, scoped, tag = 'output window, operand 2']
    %11 = vsyncpa [#allocation3], 0
    %s12 = scalar_lea.sflag [#allocation3], 1
    %13 = vsyncpa %s12, 0
    %14 = vsyncpa [#allocation6], 0
    %15 = vsyncpa [#allocation4], 0
    %s16 = scalar_lea.sflag [#allocation4], 1
    %17 = vsyncpa %s16, 0
    %18 = vsyncpa [#allocation9], 0
    %s19 = scalar_lea.sflag [#allocation9], 1
    %20 = vsyncpa %s19, 0
    loop: start=0, step=1, limit=6
    $region2: #{tpu_custom_call.1} parent=1 // loop_pre_header
      _
    $region3: #{tpu_custom_call.1} parent=1 // loop_header
      %s22 = sphi 0, %s26
      %p23 = scmp.ge.s32.totalorder %s22, 6
      %s29 = sphi 0, %s41
      %s30 = sphi 0, %s37
      %s31 = sphi 0, %s29
      %s32 = sphi 0, %s30
      %s33 = sphi 0, %s31
      %s34 = sphi 0, %s32
      %s46 = sphi 0, %s48
      %s49 = sphi 0, %s46
      %s50 = sphi 0, %s49
      %s66 = sphi 0, %s50
      %s70 = sphi 0, %s70
      %s72 = sphi 0, %s70
      %s73 = sphi 0, %s72
      %s87 = sphi 0, %s73
      %s91 = sphi 0, %s91
      %s93 = sphi 0, %s91
      %s94 = sphi 0, %s93
      %s108 = sphi 0, %s94
      %s116 = sphi 0, %s118
      %s119 = sphi 0, %s116
      %s120 = sphi 0, %s119
      %s136 = sphi 0, %s120
      %s144 = sphi 0, %s146
      %s147 = sphi 0, %s144
      %s148 = sphi 0, %s147
      %s164 = sphi 0, %s148
      %s172 = sphi 0, %s174
      %s175 = sphi 0, %s172
      %s176 = sphi 0, %s175
      %s192 = sphi 0, %s176
    $region4: #{tpu_custom_call.1} parent=1 // loop_header_branch
      %25 = sbr.rel (%p23) target = $region8
    $region5: #{tpu_custom_call.1} parent=1 // loop_body
      %s27 = ssub.s32 %s22, 1
      %s28 = ssub.s32 %s22, 2
      %s35 = sadd.s32 1, %s30
      %p36 = scmp.ge.s32.totalorder %s35, 2
      %s37 = scalar_select %p36, 0, %s35
      %s38 = sadd.s32 1, %s29
      %s39 = scalar_select %p36, %s38, %s29
      %p40 = scmp.ge.s32.totalorder %s39, 2
      %s41 = scalar_select %p40, 0, %s39
      %s42 = ssub.s32 %s29, %s41
      %s43 = ssub.s32 %s30, %s37
      %s44 = sor.u32 %s42, %s43
      %p45 = scmp.eq.s32.totalorder %s44, 0
      %s47 = sadd.s32 %s46, 1
      %s48 = scalar_select %p45, %s46, %s47
      %p51 = pneg %p45
      %p52 = scmp.eq.s32.totalorder %s22, 3
      %p53 = por %p51, %p52
      %p54 = scmp.ne.s32.totalorder %s46, %s49
      %p55 = scmp.eq.s32.totalorder %s22, 0
      %p56 = por %p54, %p55
      %p57 = scmp.ne.s32.totalorder %s46, %s49
      %p58 = scmp.eq.s32.totalorder %s27, 3
      %p59 = por %p57, %p58
      %p60 = scmp.ne.s32.totalorder %s49, %s50
      %p61 = scmp.eq.s32.totalorder %s27, 0
      %p62 = por %p60, %p61
      %p63 = scmp.ne.s32.totalorder %s49, %s50
      %p64 = scmp.eq.s32.totalorder %s28, 3
      %p65 = por %p63, %p64
      %p67 = scmp.ne.s32.totalorder %s50, %s66
      %p68 = scmp.eq.s32.totalorder %s28, 0
      %p69 = por %p67, %p68
      %s71 = sadd.s32 %s70, 1
      %p74 = scmp.eq.s32.totalorder %s22, 3
      %p75 = scmp.ne.s32.totalorder %s70, %s72
      %p76 = scmp.eq.s32.totalorder %s22, 0
      %p77 = por %p75, %p76
      %p78 = scmp.ne.s32.totalorder %s70, %s72
      %p79 = scmp.eq.s32.totalorder %s27, 3
      %p80 = por %p78, %p79
      %p81 = scmp.ne.s32.totalorder %s72, %s73
      %p82 = scmp.eq.s32.totalorder %s27, 0
      %p83 = por %p81, %p82
      %p84 = scmp.ne.s32.totalorder %s72, %s73
      %p85 = scmp.eq.s32.totalorder %s28, 3
      %p86 = por %p84, %p85
      %p88 = scmp.ne.s32.totalorder %s73, %s87
      %p89 = scmp.eq.s32.totalorder %s28, 0
      %p90 = por %p88, %p89
      %s92 = sadd.s32 %s91, 1
      %p95 = scmp.eq.s32.totalorder %s22, 3
      %p96 = scmp.ne.s32.totalorder %s91, %s93
      %p97 = scmp.eq.s32.totalorder %s22, 0
      %p98 = por %p96, %p97
      %p99 = scmp.ne.s32.totalorder %s91, %s93
      %p100 = scmp.eq.s32.totalorder %s27, 3
      %p101 = por %p99, %p100
      %p102 = scmp.ne.s32.totalorder %s93, %s94
      %p103 = scmp.eq.s32.totalorder %s27, 0
      %p104 = por %p102, %p103
      %p105 = scmp.ne.s32.totalorder %s93, %s94
      %p106 = scmp.eq.s32.totalorder %s28, 3
      %p107 = por %p105, %p106
      %p109 = scmp.ne.s32.totalorder %s94, %s108
      %p110 = scmp.eq.s32.totalorder %s28, 0
      %p111 = por %p109, %p110
      %s112 = ssub.s32 %s29, %s41
      %s113 = ssub.s32 %s30, %s37
      %s114 = sor.u32 %s112, %s113
      %p115 = scmp.eq.s32.totalorder %s114, 0
      %s117 = sadd.s32 %s116, 1
      %s118 = scalar_select %p115, %s116, %s117
      %p121 = pneg %p115
      %p122 = scmp.eq.s32.totalorder %s22, 3
      %p123 = por %p121, %p122
      %p124 = scmp.ne.s32.totalorder %s116, %s119
      %p125 = scmp.eq.s32.totalorder %s22, 0
      %p126 = por %p124, %p125
      %p127 = scmp.ne.s32.totalorder %s116, %s119
      %p128 = scmp.eq.s32.totalorder %s27, 3
      %p129 = por %p127, %p128
      %p130 = scmp.ne.s32.totalorder %s119, %s120
      %p131 = scmp.eq.s32.totalorder %s27, 0
      %p132 = por %p130, %p131
      %p133 = scmp.ne.s32.totalorder %s119, %s120
      %p134 = scmp.eq.s32.totalorder %s28, 3
      %p135 = por %p133, %p134
      %p137 = scmp.ne.s32.totalorder %s120, %s136
      %p138 = scmp.eq.s32.totalorder %s28, 0
      %p139 = por %p137, %p138
      %s140 = ssub.s32 %s29, %s41
      %s141 = ssub.s32 %s30, %s37
      %s142 = sor.u32 %s140, %s141
      %p143 = scmp.eq.s32.totalorder %s142, 0
      %s145 = sadd.s32 %s144, 1
      %s146 = scalar_select %p143, %s144, %s145
      %p149 = pneg %p143
      %p150 = scmp.eq.s32.totalorder %s22, 3
      %p151 = por %p149, %p150
      %p152 = scmp.ne.s32.totalorder %s144, %s147
      %p153 = scmp.eq.s32.totalorder %s22, 0
      %p154 = por %p152, %p153
      %p155 = scmp.ne.s32.totalorder %s144, %s147
      %p156 = scmp.eq.s32.totalorder %s27, 3
      %p157 = por %p155, %p156
      %p158 = scmp.ne.s32.totalorder %s147, %s148
      %p159 = scmp.eq.s32.totalorder %s27, 0
      %p160 = por %p158, %p159
      %p161 = scmp.ne.s32.totalorder %s147, %s148
      %p162 = scmp.eq.s32.totalorder %s28, 3
      %p163 = por %p161, %p162
      %p165 = scmp.ne.s32.totalorder %s148, %s164
      %p166 = scmp.eq.s32.totalorder %s28, 0
      %p167 = por %p165, %p166
      %s168 = ssub.s32 %s29, %s41
      %s169 = ssub.s32 %s30, %s37
      %s170 = sor.u32 %s168, %s169
      %p171 = scmp.eq.s32.totalorder %s170, 0
      %s173 = sadd.s32 %s172, 1
      %s174 = scalar_select %p171, %s172, %s173
      %p177 = pneg %p171
      %p178 = scmp.eq.s32.totalorder %s22, 3
      %p179 = por %p177, %p178
      %p180 = scmp.ne.s32.totalorder %s172, %s175
      %p181 = scmp.eq.s32.totalorder %s22, 0
      %p182 = por %p180, %p181
      %p183 = scmp.ne.s32.totalorder %s172, %s175
      %p184 = scmp.eq.s32.totalorder %s27, 3
      %p185 = por %p183, %p184
      %p186 = scmp.ne.s32.totalorder %s175, %s176
      %p187 = scmp.eq.s32.totalorder %s27, 0
      %p188 = por %p186, %p187
      %p189 = scmp.ne.s32.totalorder %s175, %s176
      %p190 = scmp.eq.s32.totalorder %s28, 3
      %p191 = por %p189, %p190
      %p193 = scmp.ne.s32.totalorder %s176, %s192
      %p194 = scmp.eq.s32.totalorder %s28, 0
      %p195 = por %p193, %p194
      %p196 = scmp.le.s32.totalorder 1, %s22
      %p197 = scmp.lt.s32.totalorder %s22, 5
      %p198 = pnand %p196, %p197
      %p199 = pneg %p198
      // Predicated region
      $region9: #{tpu_custom_call.1} parent=5 // pred_check
        _
      $region10: #{tpu_custom_call.1} parent=5 // pred_check_branch
        %201 = sbr.rel (%p198) target = $region12
      $region11: #{tpu_custom_call.1} parent=5 // pred_region
        %s202 = ssub.s32 %s22, 1
        // Predicated region
        $region13: #{tpu_custom_call.1} parent=11 // pred_check
          %p203 = pneg %p83
        $region14: #{tpu_custom_call.1} parent=11 // pred_check_branch
          %205 = sbr.rel (%p203) target = $region16
        $region15: #{tpu_custom_call.1} parent=11 // pred_region
          %s207 = ssub.s32 3072, 3072
          %208 = vsyncadd [#allocation6], %s207
          %s209 = sshll.u32 [#allocation5], 4
          %s210 = int_to_ptr.vmem [resolvable:$true] %s209
          %215 = dma.hbm_to_vmem [thread:$0]  %s1, 3072, %s210, [#allocation6], 192, 192, 12
        $region16: #{tpu_custom_call.1} parent=11 // pred_fallthru
          _
        // Predicated region
        $region17: #{tpu_custom_call.1} parent=11 // pred_check
          %p216 = pneg %p104
        $region18: #{tpu_custom_call.1} parent=11 // pred_check_branch
          %218 = sbr.rel (%p216) target = $region20
        $region19: #{tpu_custom_call.1} parent=11 // pred_region
          _
        $region20: #{tpu_custom_call.1} parent=11 // pred_fallthru
          _
      $region12: #{tpu_custom_call.1} parent=5 // pred_fallthru
        _
      %p219 = scmp.lt.s32.totalorder %s22, 4
      // Predicated region
      $region21: #{tpu_custom_call.1} parent=5 // pred_check
        %p220 = pneg %p219
      $region22: #{tpu_custom_call.1} parent=5 // pred_check_branch
        %222 = sbr.rel (%p220) target = $region24
      $region23: #{tpu_custom_call.1} parent=5 // pred_region
        // Predicated region
        $region25: #{tpu_custom_call.1} parent=23 // pred_check
          %p223 = pneg %p56
        $region26: #{tpu_custom_call.1} parent=23 // pred_check_branch
          %225 = sbr.rel (%p223) target = $region28
        $region27: #{tpu_custom_call.1} parent=23 // pred_region
          %s226 = sand.u32 %s46, 1
          %s227 = scalar_lea.sflag [#allocation3], %s226
          %s228 = sand.u32 %s46, 1
          %s229 = smul.addr %s228, 128
          %s230 = scalar_lea.vmem [#allocation2], %s229
          %s231 = smul.u32 16, %s30
          %s233 = ssub.s32 2048, 2048
          %234 = vsyncadd %s227, %s233
          %s235 = smul.addr %s29, 32
          %s236 = sadd.s32 %s231, %s235
          %s237 = smul.addr %s236, 128
          %s238 = scalar_lea.hbm %s0, %s237
          %s239 = sshll.u32 %s230, 4
          %s240 = int_to_ptr.vmem [resolvable:$true] %s239
          %245 = dma.hbm_to_vmem [thread:$0]  %s238, 2048, %s240, %s227, 128, 128, 8
        $region28: #{tpu_custom_call.1} parent=23 // pred_fallthru
          _
      $region24: #{tpu_custom_call.1} parent=5 // pred_fallthru
        _
      %p246 = scmp.le.s32.totalorder 1, %s22
      %p247 = scmp.lt.s32.totalorder %s22, 5
      %p248 = pnand %p246, %p247
      %p249 = pneg %p248
      // Predicated region
      $region29: #{tpu_custom_call.1} parent=5 // pred_check
        _
      $region30: #{tpu_custom_call.1} parent=5 // pred_check_branch
        %251 = sbr.rel (%p248) target = $region32
      $region31: #{tpu_custom_call.1} parent=5 // pred_region
        %s252 = ssub.s32 %s22, 1
        %s253 = sand.u32 %s49, 1
        %s254 = scalar_lea.sflag [#allocation3], %s253
        %s255 = sand.u32 %s49, 1
        %s256 = smul.addr %s255, 128
        %s257 = scalar_lea.vmem [#allocation2], %s256
        // Predicated region
        $region33: #{tpu_custom_call.1} parent=31 // pred_check
          %p258 = pneg %p62
        $region34: #{tpu_custom_call.1} parent=31 // pred_check_branch
          %260 = sbr.rel (%p258) target = $region36
        $region35: #{tpu_custom_call.1} parent=31 // pred_region
          %261 = dma.done %s254, 2048
        $region36: #{tpu_custom_call.1} parent=31 // pred_fallthru
          _
        // Predicated region
        $region37: #{tpu_custom_call.1} parent=31 // pred_check
          %p262 = pneg %p83
        $region38: #{tpu_custom_call.1} parent=31 // pred_check_branch
          %264 = sbr.rel (%p262) target = $region40
        $region39: #{tpu_custom_call.1} parent=31 // pred_region
          %265 = dma.done [#allocation6], 3072
        $region40: #{tpu_custom_call.1} parent=31 // pred_fallthru
          _
        %s266 = sand.u32 %s49, 1
        %s267 = scalar_lea.sflag [#allocation3], %s266
        %s268 = sand.u32 %s49, 1
        %s269 = smul.addr %s268, 128
        %s270 = scalar_lea.vmem [#allocation2], %s269
        %p271 = pneg %p62
        %p272 = pneg %p59
        %p273 = pneg %p83
        %p274 = pneg %p80
        %p275 = pneg %p104
        %p276 = pneg %p101
        %p277 = pneg %p132
        %p278 = pneg %p129
        %s279 = sand.u32 %s119, 1
        %s280 = scalar_lea.sflag [#allocation4], %s279
        %s281 = sand.u32 %s119, 1
        %s282 = smul.addr %s281, 64
        %s283 = scalar_lea.vmem [#allocation7], %s282
        %p284 = pneg %p160
        %p285 = pneg %p157
        %s286 = sand.u32 %s27, 1
        %s287 = scalar_lea.sflag [#allocation9], %s286
        %s288 = sand.u32 %s147, 1
        %s289 = smul.addr %s288, 64
        %s290 = scalar_lea.vmem [#allocation8], %s289
        %p291 = pneg %p188
        %p292 = pneg %p185
        %s293 = sand.u32 %s27, 1
        %s294 = scalar_lea.sflag [#allocation9], %s293
        %s295 = sand.u32 %s175, 1
        %s296 = smul.addr %s295, 64
        %s297 = scalar_lea.vmem [#allocation10], %s296
        %s298 = smul.u32 16, %s32
        %s299 = smul.u32 16, %s32
        %s300 = smul.u32 16, %s32
        %s301 = smul.u32 16, %s32
        %v303 = vld [vmem:[%s257] sm:$0xff]
        %v304 = vld [vmem:[%s257 + $0x8] sm:$0xff]
        %v305 = vld [vmem:[%s257 + $0x10] sm:$0xff]
        %v306 = vld [vmem:[%s257 + $0x18] sm:$0xff]
        %v307 = vld [vmem:[%s257 + $0x20] sm:$0xff]
        %v308 = vld [vmem:[%s257 + $0x28] sm:$0xff]
        %v309 = vld [vmem:[%s257 + $0x30] sm:$0xff]
        %v310 = vld [vmem:[%s257 + $0x38] sm:$0xff]
        %v311 = vld [vmem:[%s257 + $0x40] sm:$0xff]
        %v312 = vld [vmem:[%s257 + $0x48] sm:$0xff]
        %v313 = vld [vmem:[%s257 + $0x50] sm:$0xff]
        %v314 = vld [vmem:[%s257 + $0x58] sm:$0xff]
        %v315 = vld [vmem:[%s257 + $0x60] sm:$0xff]
        %v316 = vld [vmem:[%s257 + $0x68] sm:$0xff]
        %v317 = vld [vmem:[%s257 + $0x70] sm:$0xff]
        %v318 = vld [vmem:[%s257 + $0x78] sm:$0xff]
        %v319 = vpack.c.bf16 %v304, %v303
        %v320 = vpack.c.bf16 %v306, %v305
        %v321 = vpack.c.bf16 %v308, %v307
        %v322 = vpack.c.bf16 %v310, %v309
        %v323 = vpack.c.bf16 %v312, %v311
        %v324 = vpack.c.bf16 %v314, %v313
        %v325 = vpack.c.bf16 %v316, %v315
        %v326 = vpack.c.bf16 %v318, %v317
        %v327 = vld [vmem:[#allocation5] sm:$0xff]
        %v328 = vld [vmem:[#allocation5 + $0x8] sm:$0xf]
        %v329 = vld [vmem:[#allocation5 + $0xc] sm:$0xff]
        %v330 = vld [vmem:[#allocation5 + $0x14] sm:$0xf]
        %v331 = vld [vmem:[#allocation5 + $0x18] sm:$0xff]
        %v332 = vld [vmem:[#allocation5 + $0x20] sm:$0xf]
        %v333 = vld [vmem:[#allocation5 + $0x24] sm:$0xff]
        %v334 = vld [vmem:[#allocation5 + $0x2c] sm:$0xf]
        %v335 = vld [vmem:[#allocation5 + $0x30] sm:$0xff]
        %v336 = vld [vmem:[#allocation5 + $0x38] sm:$0xf]
        %v337 = vld [vmem:[#allocation5 + $0x3c] sm:$0xff]
        %v338 = vld [vmem:[#allocation5 + $0x44] sm:$0xf]
        %v339 = vld [vmem:[#allocation5 + $0x48] sm:$0xff]
        %v340 = vld [vmem:[#allocation5 + $0x50] sm:$0xf]
        %v341 = vld [vmem:[#allocation5 + $0x54] sm:$0xff]
        %v342 = vld [vmem:[#allocation5 + $0x5c] sm:$0xf]
        %v343 = vld [vmem:[#allocation5 + $0x60] sm:$0xff]
        %v344 = vld [vmem:[#allocation5 + $0x68] sm:$0xf]
        %v345 = vld [vmem:[#allocation5 + $0x6c] sm:$0xff]
        %v346 = vld [vmem:[#allocation5 + $0x74] sm:$0xf]
        %v347 = vld [vmem:[#allocation5 + $0x78] sm:$0xff]
        %v348 = vld [vmem:[#allocation5 + $0x80] sm:$0xf]
        %v349 = vld [vmem:[#allocation5 + $0x84] sm:$0xff]
        %v350 = vld [vmem:[#allocation5 + $0x8c] sm:$0xf]
        %v351 = vld [vmem:[#allocation5 + $0x90] sm:$0xff]
        %v352 = vld [vmem:[#allocation5 + $0x98] sm:$0xf]
        %v353 = vld [vmem:[#allocation5 + $0x9c] sm:$0xff]
        %v354 = vld [vmem:[#allocation5 + $0xa4] sm:$0xf]
        %v355 = vld [vmem:[#allocation5 + $0xa8] sm:$0xff]
        %v356 = vld [vmem:[#allocation5 + $0xb0] sm:$0xf]
        %v357 = vld [vmem:[#allocation5 + $0xb4] sm:$0xff]
        %v358 = vld [vmem:[#allocation5 + $0xbc] sm:$0xf]
        %v359 = vld [vmem:[%s2] sm:$0x7]
        %v361 = vlaneseq
        %v362 = vshrl.u32 %v361, 7
        %v363 = vsub.s32 0, %v362
        %v364 = vrot.slane %v359, %v363
        %v365 = vlaneseq
        %v366 = vshrl.u32 %v365, 7
        %v367 = vsub.s32 1, %v366
        %v368 = vrot.slane %v359, %v367
        %v369 = vlaneseq
        %v370 = vshrl.u32 %v369, 7
        %v371 = vsub.s32 2, %v370
        %v372 = vrot.slane %v359, %v371
        %v408 = vunpack.c.l.b16 %v327
        %v409 = vunpack.c.h.b16 %v327
        %v410 = vunpack.c.l.b16 %v328
        %v411 = vunpack.c.l.b16 %v329
        %v412 = vunpack.c.h.b16 %v329
        %v413 = vunpack.c.l.b16 %v330
        %v414 = vunpack.c.l.b16 %v331
        %v415 = vunpack.c.h.b16 %v331
        %v416 = vunpack.c.l.b16 %v332
        %v417 = vunpack.c.l.b16 %v333
        %v418 = vunpack.c.h.b16 %v333
        %v419 = vunpack.c.l.b16 %v334
        %v420 = vunpack.c.l.b16 %v335
        %v421 = vunpack.c.h.b16 %v335
        %v422 = vunpack.c.l.b16 %v336
        %v423 = vunpack.c.l.b16 %v337
        %v424 = vunpack.c.h.b16 %v337
        %v425 = vunpack.c.l.b16 %v338
        %v426 = vunpack.c.l.b16 %v339
        %v427 = vunpack.c.h.b16 %v339
        %v428 = vunpack.c.l.b16 %v340
        %v429 = vunpack.c.l.b16 %v341
        %v430 = vunpack.c.h.b16 %v341
        %v431 = vunpack.c.l.b16 %v342
        %v432 = vunpack.c.l.b16 %v343
        %v433 = vunpack.c.h.b16 %v343
        %v434 = vunpack.c.l.b16 %v344
        %v435 = vunpack.c.l.b16 %v345
        %v436 = vunpack.c.h.b16 %v345
        %v437 = vunpack.c.l.b16 %v346
        %v438 = vunpack.c.l.b16 %v347
        %v439 = vunpack.c.h.b16 %v347
        %v440 = vunpack.c.l.b16 %v348
        %v441 = vunpack.c.l.b16 %v349
        %v442 = vunpack.c.h.b16 %v349
        %v443 = vunpack.c.l.b16 %v350
        %v444 = vunpack.c.l.b16 %v351
        %v445 = vunpack.c.h.b16 %v351
        %v446 = vunpack.c.l.b16 %v352
        %v447 = vunpack.c.l.b16 %v353
        %v448 = vunpack.c.h.b16 %v353
        %v449 = vunpack.c.l.b16 %v354
        %v450 = vunpack.c.l.b16 %v355
        %v451 = vunpack.c.h.b16 %v355
        %v452 = vunpack.c.l.b16 %v356
        %v453 = vunpack.c.l.b16 %v357
        %v454 = vunpack.c.h.b16 %v357
        %v455 = vunpack.c.l.b16 %v358
        %v456 = vpack.c.b16 %v411, %v408
        %v457 = vpack.c.b16 %v412, %v409
        %v458 = vpack.c.b16 %v413, %v410
        %v459 = vpack.c.b16 %v417, %v414
        %v460 = vpack.c.b16 %v418, %v415
        %v461 = vpack.c.b16 %v419, %v416
        %v462 = vpack.c.b16 %v423, %v420
        %v463 = vpack.c.b16 %v424, %v421
        %v464 = vpack.c.b16 %v425, %v422
        %v465 = vpack.c.b16 %v429, %v426
        %v466 = vpack.c.b16 %v430, %v427
        %v467 = vpack.c.b16 %v431, %v428
        %v468 = vpack.c.b16 %v435, %v432
        %v469 = vpack.c.b16 %v436, %v433
        %v470 = vpack.c.b16 %v437, %v434
        %v471 = vpack.c.b16 %v441, %v438
        %v472 = vpack.c.b16 %v442, %v439
        %v473 = vpack.c.b16 %v443, %v440
        %v474 = vpack.c.b16 %v447, %v444
        %v475 = vpack.c.b16 %v448, %v445
        %v476 = vpack.c.b16 %v449, %v446
        %v477 = vpack.c.b16 %v453, %v450
        %v478 = vpack.c.b16 %v454, %v451
        %v479 = vpack.c.b16 %v455, %v452
        %504 = vmatprep.subr.bf16.mxu0 %v457
        %505 = vmatpush1.bf16.msra.mxu0 %v456
        %506 = vmatprep.subr.bf16.mxu0 %v460
        %507 = vmatpush1.bf16.msra.mxu0 %v459
        %508 = vmatprep.subr.bf16.mxu0 %v463
        %509 = vmatpush1.bf16.msra.mxu0 %v462
        %510 = vmatprep.subr.bf16.mxu0 %v466
        %511 = vmatpush1.bf16.msra.mxu0 %v465
        %512 = vmatprep.subr.bf16.mxu0 %v469
        %513 = vmatpush1.bf16.msra.mxu0 %v468
        %514 = vmatprep.subr.bf16.mxu0 %v472
        %515 = vmatpush1.bf16.msra.mxu0 %v471
        %516 = vmatprep.subr.bf16.mxu0 %v475
        %517 = vmatpush1.bf16.msra.mxu0 %v474
        %518 = vmatprep.subr.bf16.mxu0 %v478
        %519 = vmatpush1.bf16.msra.mxu0 %v477
        %520 = vmatprep.subr.bf16.mxu0 0
        %521 = vmatpush1.bf16.msra.mxu0 0
        %522 = vmatprep.subr.bf16.mxu0 0
        %523 = vmatpush1.bf16.msra.mxu0 0
        %524 = vmatprep.subr.bf16.mxu0 0
        %525 = vmatpush1.bf16.msra.mxu0 0
        %526 = vmatprep.subr.bf16.mxu0 0
        %527 = vmatpush1.bf16.msra.mxu0 0
        %528 = vmatprep.subr.bf16.mxu0 0
        %529 = vmatpush1.bf16.msra.mxu0 0
        %530 = vmatprep.subr.bf16.mxu0 0
        %531 = vmatpush1.bf16.msra.mxu0 0
        %532 = vmatprep.subr.bf16.mxu0 0
        %533 = vmatpush1.bf16.msra.mxu0 0
        %534 = vmatprep.subr.bf16.mxu0 0
        %535 = vmatpush1.bf16.msra.mxu0 0
        %536 = vmatprep.mubr.bf16.mxu0 0
        %537 = vmatmul.mubr.bf16.gmra.mrb[0].mxu0 %v319
        %v538 = vpop.f32.mrb[0].mxu0
        %v539 = vadd.f32 %v364, %v538
        %v540 = vpop.f32.mrb[0].mxu0
        %v541 = vadd.f32 %v368, %v540
        %v542 = vpop.f32.mrb[0].mxu0
        %v543 = vadd.f32 %v364, %v542
        %v544 = vpop.f32.mrb[0].mxu0
        %v545 = vadd.f32 %v368, %v544
        %546 = vmatprep.mubr.bf16.mxu0 0
        %547 = vmatmul.mubr.bf16.gmra.mrb[0].mxu0 %v320
        %v548 = vpop.f32.mrb[0].mxu0
        %v549 = vadd.f32 %v364, %v548
        %v550 = vpop.f32.mrb[0].mxu0
        %v551 = vadd.f32 %v368, %v550
        %v552 = vpop.f32.mrb[0].mxu0
        %v553 = vadd.f32 %v364, %v552
        %v554 = vpop.f32.mrb[0].mxu0
        %v555 = vadd.f32 %v368, %v554
        %556 = vmatprep.mubr.bf16.mxu0 0
        %557 = vmatmul.mubr.bf16.gmra.mrb[0].mxu0 %v321
        %v558 = vpop.f32.mrb[0].mxu0
        %v559 = vadd.f32 %v364, %v558
        %v560 = vpop.f32.mrb[0].mxu0
        %v561 = vadd.f32 %v368, %v560
        %v562 = vpop.f32.mrb[0].mxu0
        %v563 = vadd.f32 %v364, %v562
        %v564 = vpop.f32.mrb[0].mxu0
        %v565 = vadd.f32 %v368, %v564
        %566 = vmatprep.mubr.bf16.mxu0 0
        %567 = vmatmul.mubr.bf16.gmra.mrb[0].mxu0 %v322
        %v568 = vpop.f32.mrb[0].mxu0
        %v569 = vadd.f32 %v364, %v568
        %v570 = vpop.f32.mrb[0].mxu0
        %v571 = vadd.f32 %v368, %v570
        %v572 = vpop.f32.mrb[0].mxu0
        %v573 = vadd.f32 %v364, %v572
        %v574 = vpop.f32.mrb[0].mxu0
        %v575 = vadd.f32 %v368, %v574
        %576 = vmatprep.mubr.bf16.mxu0 0
        %577 = vmatmul.mubr.bf16.gmra.mrb[0].mxu0 %v323
        %v578 = vpop.f32.mrb[0].mxu0
        %v579 = vadd.f32 %v364, %v578
        %v580 = vpop.f32.mrb[0].mxu0
        %v581 = vadd.f32 %v368, %v580
        %v582 = vpop.f32.mrb[0].mxu0
        %v583 = vadd.f32 %v364, %v582
        %v584 = vpop.f32.mrb[0].mxu0
        %v585 = vadd.f32 %v368, %v584
        %586 = vmatprep.mubr.bf16.mxu0 0
        %587 = vmatmul.mubr.bf16.gmra.mrb[0].mxu0 %v324
        %v588 = vpop.f32.mrb[0].mxu0
        %v589 = vadd.f32 %v364, %v588
        %v590 = vpop.f32.mrb[0].mxu0
        %v591 = vadd.f32 %v368, %v590
        %v592 = vpop.f32.mrb[0].mxu0
        %v593 = vadd.f32 %v364, %v592
        %v594 = vpop.f32.mrb[0].mxu0
        %v595 = vadd.f32 %v368, %v594
        %596 = vmatprep.mubr.bf16.mxu0 0
        %597 = vmatmul.mubr.bf16.gmra.mrb[0].mxu0 %v325
        %v598 = vpop.f32.mrb[0].mxu0
        %v599 = vadd.f32 %v364, %v598
        %v600 = vpop.f32.mrb[0].mxu0
        %v601 = vadd.f32 %v368, %v600
        %v602 = vpop.f32.mrb[0].mxu0
        %v603 = vadd.f32 %v364, %v602
        %v604 = vpop.f32.mrb[0].mxu0
        %v605 = vadd.f32 %v368, %v604
        %606 = vmatprep.mubr.bf16.mxu0 0
        %607 = vmatmul.mubr.bf16.gmra.mrb[0].mxu0 %v326
        %v608 = vpop.f32.mrb[0].mxu0
        %v609 = vadd.f32 %v364, %v608
        %v610 = vpop.f32.mrb[0].mxu0
        %v611 = vadd.f32 %v368, %v610
        %v612 = vpop.f32.mrb[0].mxu0
        %v613 = vadd.f32 %v364, %v612
        %v614 = vpop.f32.mrb[0].mxu0
        %v615 = vadd.f32 %v368, %v614
        %616 = vdwg.mxu0
        %617 = vmatprep.subr.bf16.mxu0 0
        %618 = vmatpush1.bf16.msra.mxu0 %v458
        %619 = vmatprep.subr.bf16.mxu0 0
        %620 = vmatpush1.bf16.msra.mxu0 %v461
        %621 = vmatprep.subr.bf16.mxu0 0
        %622 = vmatpush1.bf16.msra.mxu0 %v464
        %623 = vmatprep.subr.bf16.mxu0 0
        %624 = vmatpush1.bf16.msra.mxu0 %v467
        %625 = vmatprep.subr.bf16.mxu0 0
        %626 = vmatpush1.bf16.msra.mxu0 %v470
        %627 = vmatprep.subr.bf16.mxu0 0
        %628 = vmatpush1.bf16.msra.mxu0 %v473
        %629 = vmatprep.subr.bf16.mxu0 0
        %630 = vmatpush1.bf16.msra.mxu0 %v476
        %631 = vmatprep.subr.bf16.mxu0 0
        %632 = vmatpush1.bf16.msra.mxu0 %v479
        %633 = vmatprep.subr.bf16.mxu0 0
        %634 = vmatpush1.bf16.msra.mxu0 0
        %635 = vmatprep.subr.bf16.mxu0 0
        %636 = vmatpush1.bf16.msra.mxu0 0
        %637 = vmatprep.subr.bf16.mxu0 0
        %638 = vmatpush1.bf16.msra.mxu0 0
        %639 = vmatprep.subr.bf16.mxu0 0
        %640 = vmatpush1.bf16.msra.mxu0 0
        %641 = vmatprep.subr.bf16.mxu0 0
        %642 = vmatpush1.bf16.msra.mxu0 0
        %643 = vmatprep.subr.bf16.mxu0 0
        %644 = vmatpush1.bf16.msra.mxu0 0
        %645 = vmatprep.subr.bf16.mxu0 0
        %646 = vmatpush1.bf16.msra.mxu0 0
        %647 = vmatprep.subr.bf16.mxu0 0
        %648 = vmatpush1.bf16.msra.mxu0 0
        %649 = vmatprep.mubr.bf16.mxu0 0
        %650 = vmatmul.mubr.bf16.gmra.mrb[0].mxu0 %v319
        %v651 = vpop.f32.mrb[0].mxu0
        %v652 = vadd.f32 %v372, %v651
        %v653 = vpop.f32.mrb[0].mxu0
        %v654 = vpop.f32.mrb[0].mxu0
        %v655 = vadd.f32 %v372, %v654
        %v656 = vpop.f32.mrb[0].mxu0
        %657 = vmatprep.mubr.bf16.mxu0 0
        %658 = vmatmul.mubr.bf16.gmra.mrb[0].mxu0 %v320
        %v659 = vpop.f32.mrb[0].mxu0
        %v660 = vadd.f32 %v372, %v659
        %v661 = vpop.f32.mrb[0].mxu0
        %v662 = vpop.f32.mrb[0].mxu0
        %v663 = vadd.f32 %v372, %v662
        %v664 = vpop.f32.mrb[0].mxu0
        %665 = vmatprep.mubr.bf16.mxu0 0
        %666 = vmatmul.mubr.bf16.gmra.mrb[0].mxu0 %v321
        %v667 = vpop.f32.mrb[0].mxu0
        %v668 = vadd.f32 %v372, %v667
        %v669 = vpop.f32.mrb[0].mxu0
        %v670 = vpop.f32.mrb[0].mxu0
        %v671 = vadd.f32 %v372, %v670
        %v672 = vpop.f32.mrb[0].mxu0
        %673 = vmatprep.mubr.bf16.mxu0 0
        %674 = vmatmul.mubr.bf16.gmra.mrb[0].mxu0 %v322
        %v675 = vpop.f32.mrb[0].mxu0
        %v676 = vadd.f32 %v372, %v675
        %v677 = vpop.f32.mrb[0].mxu0
        %v678 = vpop.f32.mrb[0].mxu0
        %v679 = vadd.f32 %v372, %v678
        %v680 = vpop.f32.mrb[0].mxu0
        %681 = vmatprep.mubr.bf16.mxu0 0
        %682 = vmatmul.mubr.bf16.gmra.mrb[0].mxu0 %v323
        %v683 = vpop.f32.mrb[0].mxu0
        %v684 = vadd.f32 %v372, %v683
        %v685 = vpop.f32.mrb[0].mxu0
        %v686 = vpop.f32.mrb[0].mxu0
        %v687 = vadd.f32 %v372, %v686
        %v688 = vpop.f32.mrb[0].mxu0
        %689 = vmatprep.mubr.bf16.mxu0 0
        %690 = vmatmul.mubr.bf16.gmra.mrb[0].mxu0 %v324
        %v691 = vpop.f32.mrb[0].mxu0
        %v692 = vadd.f32 %v372, %v691
        %v693 = vpop.f32.mrb[0].mxu0
        %v694 = vpop.f32.mrb[0].mxu0
        %v695 = vadd.f32 %v372, %v694
        %v696 = vpop.f32.mrb[0].mxu0
        %697 = vmatprep.mubr.bf16.mxu0 0
        %698 = vmatmul.mubr.bf16.gmra.mrb[0].mxu0 %v325
        %v699 = vpop.f32.mrb[0].mxu0
        %v700 = vadd.f32 %v372, %v699
        %v701 = vpop.f32.mrb[0].mxu0
        %v702 = vpop.f32.mrb[0].mxu0
        %v703 = vadd.f32 %v372, %v702
        %v704 = vpop.f32.mrb[0].mxu0
        %705 = vmatprep.mubr.bf16.mxu0 0
        %706 = vmatmul.mubr.bf16.gmra.mrb[0].mxu0 %v326
        %v707 = vpop.f32.mrb[0].mxu0
        %v708 = vadd.f32 %v372, %v707
        %v709 = vpop.f32.mrb[0].mxu0
        %v710 = vpop.f32.mrb[0].mxu0
        %v711 = vadd.f32 %v372, %v710
        %v712 = vpop.f32.mrb[0].mxu0
        %713 = vdwg.mxu0
        %v714 = vpack.c.bf16 %v543, %v539
        %v715 = vpack.c.bf16 %v553, %v549
        %v716 = vpack.c.bf16 %v563, %v559
        %v717 = vpack.c.bf16 %v573, %v569
        %v718 = vpack.c.bf16 %v583, %v579
        %v719 = vpack.c.bf16 %v593, %v589
        %v720 = vpack.c.bf16 %v603, %v599
        %v721 = vpack.c.bf16 %v613, %v609
        %v730 = vunpack.c.l.b16 %v714
        %v731 = vunpack.c.h.b16 %v714
        %v732 = vunpack.c.l.b16 %v715
        %v733 = vunpack.c.h.b16 %v715
        %v734 = vunpack.c.l.b16 %v716
        %v735 = vunpack.c.h.b16 %v716
        %v736 = vunpack.c.l.b16 %v717
        %v737 = vunpack.c.h.b16 %v717
        %v738 = vunpack.c.l.b16 %v718
        %v739 = vunpack.c.h.b16 %v718
        %v740 = vunpack.c.l.b16 %v719
        %v741 = vunpack.c.h.b16 %v719
        %v742 = vunpack.c.l.b16 %v720
        %v743 = vunpack.c.h.b16 %v720
        %v744 = vunpack.c.l.b16 %v721
        %v745 = vunpack.c.h.b16 %v721
        %v746 = vpack.c.b16 %v730, %v730
        %v747 = vpack.c.b16 %v731, %v731
        %v748 = vpack.c.b16 %v732, %v732
        %v749 = vpack.c.b16 %v733, %v733
        %v750 = vpack.c.b16 %v734, %v734
        %v751 = vpack.c.b16 %v735, %v735
        %v752 = vpack.c.b16 %v736, %v736
        %v753 = vpack.c.b16 %v737, %v737
        %v754 = vpack.c.b16 %v738, %v738
        %v755 = vpack.c.b16 %v739, %v739
        %v756 = vpack.c.b16 %v740, %v740
        %v757 = vpack.c.b16 %v741, %v741
        %v758 = vpack.c.b16 %v742, %v742
        %v759 = vpack.c.b16 %v743, %v743
        %v760 = vpack.c.b16 %v744, %v744
        %v761 = vpack.c.b16 %v745, %v745
        %778 = vst [vmem:[%s283] sm:$0xf] %v746
        %779 = vst [vmem:[%s283 + $0x4] sm:$0xf] %v747
        %780 = vst [vmem:[%s283 + $0x8] sm:$0xf] %v748
        %781 = vst [vmem:[%s283 + $0xc] sm:$0xf] %v749
        %782 = vst [vmem:[%s283 + $0x10] sm:$0xf] %v750
        %783 = vst [vmem:[%s283 + $0x14] sm:$0xf] %v751
        %784 = vst [vmem:[%s283 + $0x18] sm:$0xf] %v752
        %785 = vst [vmem:[%s283 + $0x1c] sm:$0xf] %v753
        %786 = vst [vmem:[%s283 + $0x20] sm:$0xf] %v754
        %787 = vst [vmem:[%s283 + $0x24] sm:$0xf] %v755
        %788 = vst [vmem:[%s283 + $0x28] sm:$0xf] %v756
        %789 = vst [vmem:[%s283 + $0x2c] sm:$0xf] %v757
        %790 = vst [vmem:[%s283 + $0x30] sm:$0xf] %v758
        %791 = vst [vmem:[%s283 + $0x34] sm:$0xf] %v759
        %792 = vst [vmem:[%s283 + $0x38] sm:$0xf] %v760
        %793 = vst [vmem:[%s283 + $0x3c] sm:$0xf] %v761
        %v794 = vpack.c.bf16 %v545, %v541
        %v795 = vpack.c.bf16 %v555, %v551
        %v796 = vpack.c.bf16 %v565, %v561
        %v797 = vpack.c.bf16 %v575, %v571
        %v798 = vpack.c.bf16 %v585, %v581
        %v799 = vpack.c.bf16 %v595, %v591
        %v800 = vpack.c.bf16 %v605, %v601
        %v801 = vpack.c.bf16 %v615, %v611
        %v810 = vunpack.c.l.b16 %v794
        %v811 = vunpack.c.h.b16 %v794
        %v812 = vunpack.c.l.b16 %v795
        %v813 = vunpack.c.h.b16 %v795
        %v814 = vunpack.c.l.b16 %v796
        %v815 = vunpack.c.h.b16 %v796
        %v816 = vunpack.c.l.b16 %v797
        %v817 = vunpack.c.h.b16 %v797
        %v818 = vunpack.c.l.b16 %v798
        %v819 = vunpack.c.h.b16 %v798
        %v820 = vunpack.c.l.b16 %v799
        %v821 = vunpack.c.h.b16 %v799
        %v822 = vunpack.c.l.b16 %v800
        %v823 = vunpack.c.h.b16 %v800
        %v824 = vunpack.c.l.b16 %v801
        %v825 = vunpack.c.h.b16 %v801
        %v826 = vpack.c.b16 %v810, %v810
        %v827 = vpack.c.b16 %v811, %v811
        %v828 = vpack.c.b16 %v812, %v812
        %v829 = vpack.c.b16 %v813, %v813
        %v830 = vpack.c.b16 %v814, %v814
        %v831 = vpack.c.b16 %v815, %v815
        %v832 = vpack.c.b16 %v816, %v816
        %v833 = vpack.c.b16 %v817, %v817
        %v834 = vpack.c.b16 %v818, %v818
        %v835 = vpack.c.b16 %v819, %v819
        %v836 = vpack.c.b16 %v820, %v820
        %v837 = vpack.c.b16 %v821, %v821
        %v838 = vpack.c.b16 %v822, %v822
        %v839 = vpack.c.b16 %v823, %v823
        %v840 = vpack.c.b16 %v824, %v824
        %v841 = vpack.c.b16 %v825, %v825
        %858 = vst [vmem:[%s290] sm:$0xf] %v826
        %859 = vst [vmem:[%s290 + $0x4] sm:$0xf] %v827
        %860 = vst [vmem:[%s290 + $0x8] sm:$0xf] %v828
        %861 = vst [vmem:[%s290 + $0xc] sm:$0xf] %v829
        %862 = vst [vmem:[%s290 + $0x10] sm:$0xf] %v830
        %863 = vst [vmem:[%s290 + $0x14] sm:$0xf] %v831
        %864 = vst [vmem:[%s290 + $0x18] sm:$0xf] %v832
        %865 = vst [vmem:[%s290 + $0x1c] sm:$0xf] %v833
        %866 = vst [vmem:[%s290 + $0x20] sm:$0xf] %v834
        %867 = vst [vmem:[%s290 + $0x24] sm:$0xf] %v835
        %868 = vst [vmem:[%s290 + $0x28] sm:$0xf] %v836
        %869 = vst [vmem:[%s290 + $0x2c] sm:$0xf] %v837
        %870 = vst [vmem:[%s290 + $0x30] sm:$0xf] %v838
        %871 = vst [vmem:[%s290 + $0x34] sm:$0xf] %v839
        %872 = vst [vmem:[%s290 + $0x38] sm:$0xf] %v840
        %873 = vst [vmem:[%s290 + $0x3c] sm:$0xf] %v841
        %v874 = vpack.c.bf16 %v655, %v652
        %v875 = vpack.c.bf16 %v663, %v660
        %v876 = vpack.c.bf16 %v671, %v668
        %v877 = vpack.c.bf16 %v679, %v676
        %v878 = vpack.c.bf16 %v687, %v684
        %v879 = vpack.c.bf16 %v695, %v692
        %v880 = vpack.c.bf16 %v703, %v700
        %v881 = vpack.c.bf16 %v711, %v708
        %v890 = vunpack.c.l.b16 %v874
        %v891 = vunpack.c.h.b16 %v874
        %v892 = vunpack.c.l.b16 %v875
        %v893 = vunpack.c.h.b16 %v875
        %v894 = vunpack.c.l.b16 %v876
        %v895 = vunpack.c.h.b16 %v876
        %v896 = vunpack.c.l.b16 %v877
        %v897 = vunpack.c.h.b16 %v877
        %v898 = vunpack.c.l.b16 %v878
        %v899 = vunpack.c.h.b16 %v878
        %v900 = vunpack.c.l.b16 %v879
        %v901 = vunpack.c.h.b16 %v879
        %v902 = vunpack.c.l.b16 %v880
        %v903 = vunpack.c.h.b16 %v880
        %v904 = vunpack.c.l.b16 %v881
        %v905 = vunpack.c.h.b16 %v881
        %v906 = vpack.c.b16 %v890, %v890
        %v907 = vpack.c.b16 %v891, %v891
        %v908 = vpack.c.b16 %v892, %v892
        %v909 = vpack.c.b16 %v893, %v893
        %v910 = vpack.c.b16 %v894, %v894
        %v911 = vpack.c.b16 %v895, %v895
        %v912 = vpack.c.b16 %v896, %v896
        %v913 = vpack.c.b16 %v897, %v897
        %v914 = vpack.c.b16 %v898, %v898
        %v915 = vpack.c.b16 %v899, %v899
        %v916 = vpack.c.b16 %v900, %v900
        %v917 = vpack.c.b16 %v901, %v901
        %v918 = vpack.c.b16 %v902, %v902
        %v919 = vpack.c.b16 %v903, %v903
        %v920 = vpack.c.b16 %v904, %v904
        %v921 = vpack.c.b16 %v905, %v905
        %938 = vst [vmem:[%s297] sm:$0xf] %v906
        %939 = vst [vmem:[%s297 + $0x4] sm:$0xf] %v907
        %940 = vst [vmem:[%s297 + $0x8] sm:$0xf] %v908
        %941 = vst [vmem:[%s297 + $0xc] sm:$0xf] %v909
        %942 = vst [vmem:[%s297 + $0x10] sm:$0xf] %v910
        %943 = vst [vmem:[%s297 + $0x14] sm:$0xf] %v911
        %944 = vst [vmem:[%s297 + $0x18] sm:$0xf] %v912
        %945 = vst [vmem:[%s297 + $0x1c] sm:$0xf] %v913
        %946 = vst [vmem:[%s297 + $0x20] sm:$0xf] %v914
        %947 = vst [vmem:[%s297 + $0x24] sm:$0xf] %v915
        %948 = vst [vmem:[%s297 + $0x28] sm:$0xf] %v916
        %949 = vst [vmem:[%s297 + $0x2c] sm:$0xf] %v917
        %950 = vst [vmem:[%s297 + $0x30] sm:$0xf] %v918
        %951 = vst [vmem:[%s297 + $0x34] sm:$0xf] %v919
        %952 = vst [vmem:[%s297 + $0x38] sm:$0xf] %v920
        %953 = vst [vmem:[%s297 + $0x3c] sm:$0xf] %v921
        %s954 = sand.u32 %s119, 1
        %s955 = scalar_lea.sflag [#allocation4], %s954
        %s956 = sand.u32 %s119, 1
        %s957 = smul.addr %s956, 64
        %s958 = scalar_lea.vmem [#allocation7], %s957
        %s959 = sand.u32 %s27, 1
        %s960 = scalar_lea.sflag [#allocation9], %s959
        %s961 = sand.u32 %s147, 1
        %s962 = smul.addr %s961, 64
        %s963 = scalar_lea.vmem [#allocation8], %s962
        %s964 = sand.u32 %s27, 1
        %s965 = scalar_lea.sflag [#allocation9], %s964
        %s966 = sand.u32 %s175, 1
        %s967 = smul.addr %s966, 64
        %s968 = scalar_lea.vmem [#allocation10], %s967
        // Predicated region
        $region41: #{tpu_custom_call.1} parent=31 // pred_check
          %p969 = pneg %p129
        $region42: #{tpu_custom_call.1} parent=31 // pred_check_branch
          %971 = sbr.rel (%p969) target = $region44
        $region43: #{tpu_custom_call.1} parent=31 // pred_region
          %s972 = smul.u32 16, %s32
          %s974 = ssub.s32 1024, 1024
          %975 = vsyncadd %s955, %s974
          %s976 = smul.addr %s31, 32
          %s977 = sadd.s32 %s972, %s976
          %s978 = smul.addr %s977, 64
          %s979 = scalar_lea.hbm %s3, %s978
          %s980 = sshll.u32 %s958, 4
          %s981 = int_to_ptr.vmem [resolvable:$true] %s980
          %986 = dma.vmem_to_hbm [thread:$0]  %s981, 1024, %s979, %s955, 64, 64, 4
        $region44: #{tpu_custom_call.1} parent=31 // pred_fallthru
          _
        // Predicated region
        $region45: #{tpu_custom_call.1} parent=31 // pred_check
          %p987 = pneg %p157
        $region46: #{tpu_custom_call.1} parent=31 // pred_check_branch
          %989 = sbr.rel (%p987) target = $region48
        $region47: #{tpu_custom_call.1} parent=31 // pred_region
          %s990 = smul.u32 16, %s32
          %s992 = ssub.s32 1024, 1024
          %993 = vsyncadd %s960, %s992
          %s994 = smul.addr %s31, 32
          %s995 = sadd.s32 %s990, %s994
          %s996 = smul.addr %s995, 64
          %s997 = scalar_lea.hbm %s4, %s996
          %s998 = sshll.u32 %s963, 4
          %s999 = int_to_ptr.vmem [resolvable:$true] %s998
          %1004 = dma.vmem_to_hbm [thread:$0]  %s999, 1024, %s997, %s960, 64, 64, 4
        $region48: #{tpu_custom_call.1} parent=31 // pred_fallthru
          _
        // Predicated region
        $region49: #{tpu_custom_call.1} parent=31 // pred_check
          %p1005 = pneg %p185
        $region50: #{tpu_custom_call.1} parent=31 // pred_check_branch
          %1007 = sbr.rel (%p1005) target = $region52
        $region51: #{tpu_custom_call.1} parent=31 // pred_region
          %s1008 = smul.u32 16, %s32
          %s1010 = ssub.s32 1024, 1024
          %1011 = vsyncadd %s965, %s1010
          %s1012 = smul.addr %s31, 32
          %s1013 = sadd.s32 %s1008, %s1012
          %s1014 = smul.addr %s1013, 64
          %s1015 = scalar_lea.hbm %s5, %s1014
          %s1016 = sshll.u32 %s968, 4
          %s1017 = int_to_ptr.vmem [resolvable:$true] %s1016
          %1022 = dma.vmem_to_hbm [thread:$0]  %s1017, 1024, %s1015, %s965, 64, 64, 4
        $region52: #{tpu_custom_call.1} parent=31 // pred_fallthru
          _
      $region32: #{tpu_custom_call.1} parent=5 // pred_fallthru
        _
      %p1023 = scmp.le.s32.totalorder 2, %s22
      // Predicated region
      $region53: #{tpu_custom_call.1} parent=5 // pred_check
        %p1024 = pneg %p1023
      $region54: #{tpu_custom_call.1} parent=5 // pred_check_branch
        %1026 = sbr.rel (%p1024) target = $region56
      $region55: #{tpu_custom_call.1} parent=5 // pred_region
        %s1027 = ssub.s32 %s22, 2
        // Predicated region
        $region57: #{tpu_custom_call.1} parent=55 // pred_check
          %p1028 = pneg %p135
        $region58: #{tpu_custom_call.1} parent=55 // pred_check_branch
          %1030 = sbr.rel (%p1028) target = $region60
        $region59: #{tpu_custom_call.1} parent=55 // pred_region
          %s1031 = sand.u32 %s120, 1
          %s1032 = scalar_lea.sflag [#allocation4], %s1031
          %s1033 = sand.u32 %s120, 1
          %s1034 = smul.addr %s1033, 64
          %s1035 = scalar_lea.vmem [#allocation7], %s1034
          %1036 = dma.done %s1032, 1024
        $region60: #{tpu_custom_call.1} parent=55 // pred_fallthru
          _
        // Predicated region
        $region61: #{tpu_custom_call.1} parent=55 // pred_check
          %p1037 = pneg %p163
        $region62: #{tpu_custom_call.1} parent=55 // pred_check_branch
          %1039 = sbr.rel (%p1037) target = $region64
        $region63: #{tpu_custom_call.1} parent=55 // pred_region
          %s1040 = sand.u32 %s28, 1
          %s1041 = scalar_lea.sflag [#allocation9], %s1040
          %s1042 = sand.u32 %s148, 1
          %s1043 = smul.addr %s1042, 64
          %s1044 = scalar_lea.vmem [#allocation8], %s1043
          %1045 = dma.done %s1041, 1024
        $region64: #{tpu_custom_call.1} parent=55 // pred_fallthru
          _
        // Predicated region
        $region65: #{tpu_custom_call.1} parent=55 // pred_check
          %p1046 = pneg %p191
        $region66: #{tpu_custom_call.1} parent=55 // pred_check_branch
          %1048 = sbr.rel (%p1046) target = $region68
        $region67: #{tpu_custom_call.1} parent=55 // pred_region
          %s1049 = sand.u32 %s28, 1
          %s1050 = scalar_lea.sflag [#allocation9], %s1049
          %s1051 = sand.u32 %s176, 1
          %s1052 = smul.addr %s1051, 64
          %s1053 = scalar_lea.vmem [#allocation10], %s1052
          %1054 = dma.done %s1050, 1024
        $region68: #{tpu_custom_call.1} parent=55 // pred_fallthru
          _
      $region56: #{tpu_custom_call.1} parent=5 // pred_fallthru
        _
    $region6: #{tpu_custom_call.1} parent=1 // loop_footer
      %s26 = sadd.s32 1, %s22
    $region7: #{tpu_custom_call.1} parent=1 // loop_footer_branch
      %21 = sbr.rel target = $region3
    $region8: #{tpu_custom_call.1} parent=1 // loop_exit
      _
    %1055 = vsyncpa [#allocation3], 1
    %s1056 = scalar_lea.sflag [#allocation3], 1
    %1057 = vsyncpa %s1056, 1
    %1058 = vsyncpa [#allocation6], 1
    %1059 = vsyncpa [#allocation4], 1
    %s1060 = scalar_lea.sflag [#allocation4], 1
    %1061 = vsyncpa %s1060, 1
    %1062 = vsyncpa [#allocation9], 1
    %s1063 = scalar_lea.sflag [#allocation9], 1
    %1064 = vsyncpa %s1063, 1

// kernel: tpu_custom_call.1
$region0: #{tpu_custom_call.1}
  #allocation0 [shape = 'u32[]', space=smem, size = 0x4, offset = 0x4, fixed_abs, tag = 'smem constant byte address 0x4 - core index']
  #allocation1 [shape = 'u32[144,128]{1,0:T(1,128)}', space=vmem, size = 0x12000, scoped, tag = 'internal scratch']
  %s0 = inlined_call_operand.hbm [shape: f32[2,256,128], index: 0, kind: input, shape index: {}]
  %s1 = inlined_call_operand.hbm [shape: bf16[128,384], index: 1, kind: input, shape index: {}]
  %s2 = inlined_call_operand.vmem [shape: f32[1,384], index: 2, kind: input, shape index: {}]
  %s3 = inlined_call_operand.hbm [shape: bf16[2,256,128], index: 3, kind: output, shape index: {0}]
  %s4 = inlined_call_operand.hbm [shape: bf16[2,256,128], index: 4, kind: output, shape index: {1}]
  %s5 = inlined_call_operand.hbm [shape: bf16[2,256,128], index: 5, kind: output, shape index: {2}]
  %6 = xla_tuple %s3, %s4, %s5
  %s7 = sld [smem:[#allocation0]]
  $region69: #{tpu_custom_call.1} parent=0
    _
  %s9 = ssub.s32 1, %s7
  %s10 = scalar_select 0, %s9, %s7
  $region1: #{tpu_custom_call.1} parent=0
    #allocation2 [shape = 'u8[131072]{0}', space=vmem, size = 0x20000, scoped, tag = 'input window, operand 0']
    #allocation3 [shape = 's32[2]{0}', space=sflag, size = 0x8, scoped, tag = 'scoped memory for tpu_custom_call.1']
    #allocation4 [shape = 's32[2]{0}', space=sflag, size = 0x8, scoped, tag = 'scoped memory for tpu_custom_call.1']
    #allocation5 [shape = 'u8[98304]{0}', space=vmem, size = 0x18000, scoped, tag = 'input window, operand 1, single buffered']
    #allocation6 [shape = 's32[1]{0}', space=sflag, size = 0x4, scoped, tag = 'scoped memory for tpu_custom_call.1']
    #allocation7 [shape = 'u8[65536]{0}', space=vmem, size = 0x10000, scoped, tag = 'output window, operand 0']
    #allocation8 [shape = 'u8[65536]{0}', space=vmem, size = 0x10000, scoped, tag = 'output window, operand 1']
    #allocation9 [shape = 's32[2]{0}', space=sflag, size = 0x8, scoped, tag = 'scoped memory for tpu_custom_call.1']
    #allocation10 [shape = 'u8[65536]{0}', space=vmem, size = 0x10000, scoped, tag = 'output window, operand 2']
    %11 = vsyncpa [#allocation3], 0
    %s12 = scalar_lea.sflag [#allocation3], 1
    %13 = vsyncpa %s12, 0
    %14 = vsyncpa [#allocation6], 0
    %15 = vsyncpa [#allocation4], 0
    %s16 = scalar_lea.sflag [#allocation4], 1
    %17 = vsyncpa %s16, 0
    %18 = vsyncpa [#allocation9], 0
    %s19 = scalar_lea.sflag [#allocation9], 1
    %20 = vsyncpa %s19, 0
    loop: start=0, step=1, limit=6
    $region2: #{tpu_custom_call.1} parent=1 // loop_pre_header
      _
    $region3: #{tpu_custom_call.1} parent=1 // loop_header
      %s22 = sphi 0, %s26
      %p23 = scmp.ge.s32.totalorder %s22, 6
      %s29 = sphi 0, %s41
      %s30 = sphi 0, %s37
      %s31 = sphi 0, %s29
      %s32 = sphi 0, %s30
      %s33 = sphi 0, %s31
      %s34 = sphi 0, %s32
      %s46 = sphi 0, %s48
      %s49 = sphi 0, %s46
      %s50 = sphi 0, %s49
      %s66 = sphi 0, %s50
      %s70 = sphi 0, %s70
      %s72 = sphi 0, %s70
      %s73 = sphi 0, %s72
      %s87 = sphi 0, %s73
      %s91 = sphi 0, %s91
      %s93 = sphi 0, %s91
      %s94 = sphi 0, %s93
      %s108 = sphi 0, %s94
      %s116 = sphi 0, %s118
      %s119 = sphi 0, %s116
      %s120 = sphi 0, %s119
      %s136 = sphi 0, %s120
      %s144 = sphi 0, %s146
      %s147 = sphi 0, %s144
      %s148 = sphi 0, %s147
      %s164 = sphi 0, %s148
      %s172 = sphi 0, %s174
      %s175 = sphi 0, %s172
      %s176 = sphi 0, %s175
      %s192 = sphi 0, %s176
    $region4: #{tpu_custom_call.1} parent=1 // loop_header_branch
      %25 = sbr.rel (%p23) target = $region8
    $region5: #{tpu_custom_call.1} parent=1 // loop_body
      %s27 = ssub.s32 %s22, 1
      %s28 = ssub.s32 %s22, 2
      %s35 = sadd.s32 1, %s30
      %p36 = scmp.ge.s32.totalorder %s35, 2
      %s37 = scalar_select %p36, 0, %s35
      %s38 = sadd.s32 1, %s29
      %s39 = scalar_select %p36, %s38, %s29
      %p40 = scmp.ge.s32.totalorder %s39, 2
      %s41 = scalar_select %p40, 0, %s39
      %s42 = ssub.s32 %s29, %s41
      %s43 = ssub.s32 %s30, %s37
      %s44 = sor.u32 %s42, %s43
      %p45 = scmp.eq.s32.totalorder %s44, 0
      %s47 = sadd.s32 %s46, 1
      %s48 = scalar_select %p45, %s46, %s47
      %p51 = pneg %p45
      %p52 = scmp.eq.s32.totalorder %s22, 3
      %p53 = por %p51, %p52
      %p54 = scmp.ne.s32.totalorder %s46, %s49
      %p55 = scmp.eq.s32.totalorder %s22, 0
      %p56 = por %p54, %p55
      %p57 = scmp.ne.s32.totalorder %s46, %s49
      %p58 = scmp.eq.s32.totalorder %s27, 3
      %p59 = por %p57, %p58
      %p60 = scmp.ne.s32.totalorder %s49, %s50
      %p61 = scmp.eq.s32.totalorder %s27, 0
      %p62 = por %p60, %p61
      %p63 = scmp.ne.s32.totalorder %s49, %s50
      %p64 = scmp.eq.s32.totalorder %s28, 3
      %p65 = por %p63, %p64
      %p67 = scmp.ne.s32.totalorder %s50, %s66
      %p68 = scmp.eq.s32.totalorder %s28, 0
      %p69 = por %p67, %p68
      %s71 = sadd.s32 %s70, 1
      %p74 = scmp.eq.s32.totalorder %s22, 3
      %p75 = scmp.ne.s32.totalorder %s70, %s72
      %p76 = scmp.eq.s32.totalorder %s22, 0
      %p77 = por %p75, %p76
      %p78 = scmp.ne.s32.totalorder %s70, %s72
      %p79 = scmp.eq.s32.totalorder %s27, 3
      %p80 = por %p78, %p79
      %p81 = scmp.ne.s32.totalorder %s72, %s73
      %p82 = scmp.eq.s32.totalorder %s27, 0
      %p83 = por %p81, %p82
      %p84 = scmp.ne.s32.totalorder %s72, %s73
      %p85 = scmp.eq.s32.totalorder %s28, 3
      %p86 = por %p84, %p85
      %p88 = scmp.ne.s32.totalorder %s73, %s87
      %p89 = scmp.eq.s32.totalorder %s28, 0
      %p90 = por %p88, %p89
      %s92 = sadd.s32 %s91, 1
      %p95 = scmp.eq.s32.totalorder %s22, 3
      %p96 = scmp.ne.s32.totalorder %s91, %s93
      %p97 = scmp.eq.s32.totalorder %s22, 0
      %p98 = por %p96, %p97
      %p99 = scmp.ne.s32.totalorder %s91, %s93
      %p100 = scmp.eq.s32.totalorder %s27, 3
      %p101 = por %p99, %p100
      %p102 = scmp.ne.s32.totalorder %s93, %s94
      %p103 = scmp.eq.s32.totalorder %s27, 0
      %p104 = por %p102, %p103
      %p105 = scmp.ne.s32.totalorder %s93, %s94
      %p106 = scmp.eq.s32.totalorder %s28, 3
      %p107 = por %p105, %p106
      %p109 = scmp.ne.s32.totalorder %s94, %s108
      %p110 = scmp.eq.s32.totalorder %s28, 0
      %p111 = por %p109, %p110
      %s112 = ssub.s32 %s29, %s41
      %s113 = ssub.s32 %s30, %s37
      %s114 = sor.u32 %s112, %s113
      %p115 = scmp.eq.s32.totalorder %s114, 0
      %s117 = sadd.s32 %s116, 1
      %s118 = scalar_select %p115, %s116, %s117
      %p121 = pneg %p115
      %p122 = scmp.eq.s32.totalorder %s22, 3
      %p123 = por %p121, %p122
      %p124 = scmp.ne.s32.totalorder %s116, %s119
      %p125 = scmp.eq.s32.totalorder %s22, 0
      %p126 = por %p124, %p125
      %p127 = scmp.ne.s32.totalorder %s116, %s119
      %p128 = scmp.eq.s32.totalorder %s27, 3
      %p129 = por %p127, %p128
      %p130 = scmp.ne.s32.totalorder %s119, %s120
      %p131 = scmp.eq.s32.totalorder %s27, 0
      %p132 = por %p130, %p131
      %p133 = scmp.ne.s32.totalorder %s119, %s120
      %p134 = scmp.eq.s32.totalorder %s28, 3
      %p135 = por %p133, %p134
      %p137 = scmp.ne.s32.totalorder %s120, %s136
      %p138 = scmp.eq.s32.totalorder %s28, 0
      %p139 = por %p137, %p138
      %s140 = ssub.s32 %s29, %s41
      %s141 = ssub.s32 %s30, %s37
      %s142 = sor.u32 %s140, %s141
      %p143 = scmp.eq.s32.totalorder %s142, 0
      %s145 = sadd.s32 %s144, 1
      %s146 = scalar_select %p143, %s144, %s145
      %p149 = pneg %p143
      %p150 = scmp.eq.s32.totalorder %s22, 3
      %p151 = por %p149, %p150
      %p152 = scmp.ne.s32.totalorder %s144, %s147
      %p153 = scmp.eq.s32.totalorder %s22, 0
      %p154 = por %p152, %p153
      %p155 = scmp.ne.s32.totalorder %s144, %s147
      %p156 = scmp.eq.s32.totalorder %s27, 3
      %p157 = por %p155, %p156
      %p158 = scmp.ne.s32.totalorder %s147, %s148
      %p159 = scmp.eq.s32.totalorder %s27, 0
      %p160 = por %p158, %p159
      %p161 = scmp.ne.s32.totalorder %s147, %s148
      %p162 = scmp.eq.s32.totalorder %s28, 3
      %p163 = por %p161, %p162
      %p165 = scmp.ne.s32.totalorder %s148, %s164
      %p166 = scmp.eq.s32.totalorder %s28, 0
      %p167 = por %p165, %p166
      %s168 = ssub.s32 %s29, %s41
      %s169 = ssub.s32 %s30, %s37
      %s170 = sor.u32 %s168, %s169
      %p171 = scmp.eq.s32.totalorder %s170, 0
      %s173 = sadd.s32 %s172, 1
      %s174 = scalar_select %p171, %s172, %s173
      %p177 = pneg %p171
      %p178 = scmp.eq.s32.totalorder %s22, 3
      %p179 = por %p177, %p178
      %p180 = scmp.ne.s32.totalorder %s172, %s175
      %p181 = scmp.eq.s32.totalorder %s22, 0
      %p182 = por %p180, %p181
      %p183 = scmp.ne.s32.totalorder %s172, %s175
      %p184 = scmp.eq.s32.totalorder %s27, 3
      %p185 = por %p183, %p184
      %p186 = scmp.ne.s32.totalorder %s175, %s176
      %p187 = scmp.eq.s32.totalorder %s27, 0
      %p188 = por %p186, %p187
      %p189 = scmp.ne.s32.totalorder %s175, %s176
      %p190 = scmp.eq.s32.totalorder %s28, 3
      %p191 = por %p189, %p190
      %p193 = scmp.ne.s32.totalorder %s176, %s192
      %p194 = scmp.eq.s32.totalorder %s28, 0
      %p195 = por %p193, %p194
      %p196 = scmp.le.s32.totalorder 1, %s22
      %p197 = scmp.lt.s32.totalorder %s22, 5
      %p198 = pnand %p196, %p197
      %p199 = pneg %p198
      // Predicated region
      $region9: #{tpu_custom_call.1} parent=5 // pred_check
        _
      $region10: #{tpu_custom_call.1} parent=5 // pred_check_branch
        %201 = sbr.rel (%p198) target = $region12
      $region11: #{tpu_custom_call.1} parent=5 // pred_region
        %s202 = ssub.s32 %s22, 1
        // Predicated region
        $region13: #{tpu_custom_call.1} parent=11 // pred_check
          %p203 = pneg %p83
        $region14: #{tpu_custom_call.1} parent=11 // pred_check_branch
          %205 = sbr.rel (%p203) target = $region16
        $region15: #{tpu_custom_call.1} parent=11 // pred_region
          %s207 = ssub.s32 3072, 3072
          %208 = vsyncadd [#allocation6], %s207
          %s209 = sshll.u32 [#allocation5], 4
          %s210 = int_to_ptr.vmem [resolvable:$true] %s209
          %215 = dma.hbm_to_vmem [thread:$0]  %s1, 3072, %s210, [#allocation6], 192, 192, 12
        $region16: #{tpu_custom_call.1} parent=11 // pred_fallthru
          _
        // Predicated region
        $region17: #{tpu_custom_call.1} parent=11 // pred_check
          %p216 = pneg %p104
        $region18: #{tpu_custom_call.1} parent=11 // pred_check_branch
          %218 = sbr.rel (%p216) target = $region20
        $region19: #{tpu_custom_call.1} parent=11 // pred_region
          _
        $region20: #{tpu_custom_call.1} parent=11 // pred_fallthru
          _
      $region12: #{tpu_custom_call.1} parent=5 // pred_fallthru
        _
      %p219 = scmp.lt.s32.totalorder %s22, 4
      // Predicated region
      $region21: #{tpu_custom_call.1} parent=5 // pred_check
        %p220 = pneg %p219
      $region22: #{tpu_custom_call.1} parent=5 // pred_check_branch
        %222 = sbr.rel (%p220) target = $region24
      $region23: #{tpu_custom_call.1} parent=5 // pred_region
        // Predicated region
        $region25: #{tpu_custom_call.1} parent=23 // pred_check
          %p223 = pneg %p56
        $region26: #{tpu_custom_call.1} parent=23 // pred_check_branch
          %225 = sbr.rel (%p223) target = $region28
        $region27: #{tpu_custom_call.1} parent=23 // pred_region
          %s226 = sand.u32 %s46, 1
          %s227 = scalar_lea.sflag [#allocation3], %s226
          %s228 = sand.u32 %s46, 1
          %s229 = smul.addr %s228, 128
          %s230 = scalar_lea.vmem [#allocation2], %s229
          %s231 = smul.u32 16, %s30
          %s233 = ssub.s32 2048, 2048
          %234 = vsyncadd %s227, %s233
          %s235 = smul.addr %s29, 32
          %s236 = sadd.s32 %s231, %s235
          %s237 = smul.addr %s236, 128
          %s238 = scalar_lea.hbm %s0, %s237
          %s239 = sshll.u32 %s230, 4
          %s240 = int_to_ptr.vmem [resolvable:$true] %s239
          %245 = dma.hbm_to_vmem [thread:$0]  %s238, 2048, %s240, %s227, 128, 128, 8
        $region28: #{tpu_custom_call.1} parent=23 // pred_fallthru
          _
      $region24: #{tpu_custom_call.1} parent=5 // pred_fallthru
        _
      %p246 = scmp.le.s32.totalorder 1, %s22
      %p247 = scmp.lt.s32.totalorder %s22, 5
      %p248 = pnand %p246, %p247
      %p249 = pneg %p248
      // Predicated region
      $region29: #{tpu_custom_call.1} parent=5 // pred_check
        _
      $region30: #{tpu_custom_call.1} parent=5 // pred_check_branch
        %251 = sbr.rel (%p248) target = $region32
      $region31: #{tpu_custom_call.1} parent=5 // pred_region
        %s252 = ssub.s32 %s22, 1
        %s253 = sand.u32 %s49, 1
        %s254 = scalar_lea.sflag [#allocation3], %s253
        %s255 = sand.u32 %s49, 1
        %s256 = smul.addr %s255, 128
        %s257 = scalar_lea.vmem [#allocation2], %s256
        // Predicated region
        $region33: #{tpu_custom_call.1} parent=31 // pred_check
          %p258 = pneg %p62
        $region34: #{tpu_custom_call.1} parent=31 // pred_check_branch
          %260 = sbr.rel (%p258) target = $region36
        $region35: #{tpu_custom_call.1} parent=31 // pred_region
          %261 = dma.done %s254, 2048
        $region36: #{tpu_custom_call.1} parent=31 // pred_fallthru
          _
        // Predicated region
        $region37: #{tpu_custom_call.1} parent=31 // pred_check
          %p262 = pneg %p83
        $region38: #{tpu_custom_call.1} parent=31 // pred_check_branch
          %264 = sbr.rel (%p262) target = $region40
        $region39: #{tpu_custom_call.1} parent=31 // pred_region
          %265 = dma.done [#allocation6], 3072
        $region40: #{tpu_custom_call.1} parent=31 // pred_fallthru
          _
        %s266 = sand.u32 %s49, 1
        %s267 = scalar_lea.sflag [#allocation3], %s266
        %s268 = sand.u32 %s49, 1
        %s269 = smul.addr %s268, 128
        %s270 = scalar_lea.vmem [#allocation2], %s269
        %p271 = pneg %p62
        %p272 = pneg %p59
        %p273 = pneg %p83
        %p274 = pneg %p80
        %p275 = pneg %p104
        %p276 = pneg %p101
        %p277 = pneg %p132
        %p278 = pneg %p129
        %s279 = sand.u32 %s119, 1
        %s280 = scalar_lea.sflag [#allocation4], %s279
        %s281 = sand.u32 %s119, 1
        %s282 = smul.addr %s281, 64
        %s283 = scalar_lea.vmem [#allocation7], %s282
        %p284 = pneg %p160
        %p285 = pneg %p157
        %s286 = sand.u32 %s27, 1
        %s287 = scalar_lea.sflag [#allocation9], %s286
        %s288 = sand.u32 %s147, 1
        %s289 = smul.addr %s288, 64
        %s290 = scalar_lea.vmem [#allocation8], %s289
        %p291 = pneg %p188
        %p292 = pneg %p185
        %s293 = sand.u32 %s27, 1
        %s294 = scalar_lea.sflag [#allocation9], %s293
        %s295 = sand.u32 %s175, 1
        %s296 = smul.addr %s295, 64
        %s297 = scalar_lea.vmem [#allocation10], %s296
        %s298 = smul.u32 16, %s32
        %s299 = smul.u32 16, %s32
        %s300 = smul.u32 16, %s32
        %s301 = smul.u32 16, %s32
        %v303 = vld [vmem:[%s257] sm:$0xff]
        %v304 = vld [vmem:[%s257 + $0x8] sm:$0xff]
        %v305 = vld [vmem:[%s257 + $0x10] sm:$0xff]
        %v306 = vld [vmem:[%s257 + $0x18] sm:$0xff]
        %v307 = vld [vmem:[%s257 + $0x20] sm:$0xff]
        %v308 = vld [vmem:[%s257 + $0x28] sm:$0xff]
        %v309 = vld [vmem:[%s257 + $0x30] sm:$0xff]
        %v310 = vld [vmem:[%s257 + $0x38] sm:$0xff]
        %v311 = vld [vmem:[%s257 + $0x40] sm:$0xff]
        %v312 = vld [vmem:[%s257 + $0x48] sm:$0xff]
        %v313 = vld [vmem:[%s257 + $0x50] sm:$0xff]
        %v314 = vld [vmem:[%s257 + $0x58] sm:$0xff]
        %v315 = vld [vmem:[%s257 + $0x60] sm:$0xff]
        %v316 = vld [vmem:[%s257 + $0x68] sm:$0xff]
        %v317 = vld [vmem:[%s257 + $0x70] sm:$0xff]
        %v318 = vld [vmem:[%s257 + $0x78] sm:$0xff]
        %v319 = vpack.c.bf16 %v304, %v303
        %v320 = vpack.c.bf16 %v306, %v305
        %v321 = vpack.c.bf16 %v308, %v307
        %v322 = vpack.c.bf16 %v310, %v309
        %v323 = vpack.c.bf16 %v312, %v311
        %v324 = vpack.c.bf16 %v314, %v313
        %v325 = vpack.c.bf16 %v316, %v315
        %v326 = vpack.c.bf16 %v318, %v317
        %v327 = vld [vmem:[#allocation5] sm:$0xff]
        %v328 = vld [vmem:[#allocation5 + $0x8] sm:$0xf]
        %v329 = vld [vmem:[#allocation5 + $0xc] sm:$0xff]
        %v330 = vld [vmem:[#allocation5 + $0x14] sm:$0xf]
        %v331 = vld [vmem:[#allocation5 + $0x18] sm:$0xff]
        %v332 = vld [vmem:[#allocation5 + $0x20] sm:$0xf]
        %v333 = vld [vmem:[#allocation5 + $0x24] sm:$0xff]
        %v334 = vld [vmem:[#allocation5 + $0x2c] sm:$0xf]
        %v335 = vld [vmem:[#allocation5 + $0x30] sm:$0xff]
        %v336 = vld [vmem:[#allocation5 + $0x38] sm:$0xf]
        %v337 = vld [vmem:[#allocation5 + $0x3c] sm:$0xff]
        %v338 = vld [vmem:[#allocation5 + $0x44] sm:$0xf]
        %v339 = vld [vmem:[#allocation5 + $0x48] sm:$0xff]
        %v340 = vld [vmem:[#allocation5 + $0x50] sm:$0xf]
        %v341 = vld [vmem:[#allocation5 + $0x54] sm:$0xff]
        %v342 = vld [vmem:[#allocation5 + $0x5c] sm:$0xf]
        %v343 = vld [vmem:[#allocation5 + $0x60] sm:$0xff]
        %v344 = vld [vmem:[#allocation5 + $0x68] sm:$0xf]
        %v345 = vld [vmem:[#allocation5 + $0x6c] sm:$0xff]
        %v346 = vld [vmem:[#allocation5 + $0x74] sm:$0xf]
        %v347 = vld [vmem:[#allocation5 + $0x78] sm:$0xff]
        %v348 = vld [vmem:[#allocation5 + $0x80] sm:$0xf]
        %v349 = vld [vmem:[#allocation5 + $0x84] sm:$0xff]
        %v350 = vld [vmem:[#allocation5 + $0x8c] sm:$0xf]
        %v351 = vld [vmem:[#allocation5 + $0x90] sm:$0xff]
        %v352 = vld [vmem:[#allocation5 + $0x98] sm:$0xf]
        %v353 = vld [vmem:[#allocation5 + $0x9c] sm:$0xff]
        %v354 = vld [vmem:[#allocation5 + $0xa4] sm:$0xf]
        %v355 = vld [vmem:[#allocation5 + $0xa8] sm:$0xff]
        %v356 = vld [vmem:[#allocation5 + $0xb0] sm:$0xf]
        %v357 = vld [vmem:[#allocation5 + $0xb4] sm:$0xff]
        %v358 = vld [vmem:[#allocation5 + $0xbc] sm:$0xf]
        %v359 = vld [vmem:[%s2] sm:$0x7]
        %v361 = vlaneseq
        %v362 = vshrl.u32 %v361, 7
        %v363 = vsub.s32 0, %v362
        %v364 = vrot.slane %v359, %v363
        %v365 = vlaneseq
        %v366 = vshrl.u32 %v365, 7
        %v367 = vsub.s32 1, %v366
        %v368 = vrot.slane %v359, %v367
        %v369 = vlaneseq
        %v370 = vshrl.u32 %v369, 7
        %v371 = vsub.s32 2, %v370
        %v372 = vrot.slane %v359, %v371
        %v408 = vunpack.c.l.b16 %v327
        %v409 = vunpack.c.h.b16 %v327
        %v410 = vunpack.c.l.b16 %v328
        %v411 = vunpack.c.l.b16 %v329
        %v412 = vunpack.c.h.b16 %v329
        %v413 = vunpack.c.l.b16 %v330
        %v414 = vunpack.c.l.b16 %v331
        %v415 = vunpack.c.h.b16 %v331
        %v416 = vunpack.c.l.b16 %v332
        %v417 = vunpack.c.l.b16 %v333
        %v418 = vunpack.c.h.b16 %v333
        %v419 = vunpack.c.l.b16 %v334
        %v420 = vunpack.c.l.b16 %v335
        %v421 = vunpack.c.h.b16 %v335
        %v422 = vunpack.c.l.b16 %v336
        %v423 = vunpack.c.l.b16 %v337
        %v424 = vunpack.c.h.b16 %v337
        %v425 = vunpack.c.l.b16 %v338
        %v426 = vunpack.c.l.b16 %v339
        %v427 = vunpack.c.h.b16 %v339
        %v428 = vunpack.c.l.b16 %v340
        %v429 = vunpack.c.l.b16 %v341
        %v430 = vunpack.c.h.b16 %v341
        %v431 = vunpack.c.l.b16 %v342
        %v432 = vunpack.c.l.b16 %v343
        %v433 = vunpack.c.h.b16 %v343
        %v434 = vunpack.c.l.b16 %v344
        %v435 = vunpack.c.l.b16 %v345
        %v436 = vunpack.c.h.b16 %v345
        %v437 = vunpack.c.l.b16 %v346
        %v438 = vunpack.c.l.b16 %v347
        %v439 = vunpack.c.h.b16 %v347
        %v440 = vunpack.c.l.b16 %v348
        %v441 = vunpack.c.l.b16 %v349
        %v442 = vunpack.c.h.b16 %v349
        %v443 = vunpack.c.l.b16 %v350
        %v444 = vunpack.c.l.b16 %v351
        %v445 = vunpack.c.h.b16 %v351
        %v446 = vunpack.c.l.b16 %v352
        %v447 = vunpack.c.l.b16 %v353
        %v448 = vunpack.c.h.b16 %v353
        %v449 = vunpack.c.l.b16 %v354
        %v450 = vunpack.c.l.b16 %v355
        %v451 = vunpack.c.h.b16 %v355
        %v452 = vunpack.c.l.b16 %v356
        %v453 = vunpack.c.l.b16 %v357
        %v454 = vunpack.c.h.b16 %v357
        %v455 = vunpack.c.l.b16 %v358
        %v456 = vpack.c.b16 %v411, %v408
        %v457 = vpack.c.b16 %v412, %v409
        %v458 = vpack.c.b16 %v413, %v410
        %v459 = vpack.c.b16 %v417, %v414
        %v460 = vpack.c.b16 %v418, %v415
        %v461 = vpack.c.b16 %v419, %v416
        %v462 = vpack.c.b16 %v423, %v420
        %v463 = vpack.c.b16 %v424, %v421
        %v464 = vpack.c.b16 %v425, %v422
        %v465 = vpack.c.b16 %v429, %v426
        %v466 = vpack.c.b16 %v430, %v427
        %v467 = vpack.c.b16 %v431, %v428
        %v468 = vpack.c.b16 %v435, %v432
        %v469 = vpack.c.b16 %v436, %v433
        %v470 = vpack.c.b16 %v437, %v434
        %v471 = vpack.c.b16 %v441, %v438
        %v472 = vpack.c.b16 %v442, %v439
        %v473 = vpack.c.b16 %v443, %v440
        %v474 = vpack.c.b16 %v447, %v444
        %v475 = vpack.c.b16 %v448, %v445
        %v476 = vpack.c.b16 %v449, %v446
        %v477 = vpack.c.b16 %v453, %v450
        %v478 = vpack.c.b16 %v454, %v451
        %v479 = vpack.c.b16 %v455, %v452
        %504 = vmatprep.subr.bf16.mxu0 %v457
        %505 = vmatpush1.bf16.msra.mxu0 %v456
        %506 = vmatprep.subr.bf16.mxu0 %v460
        %507 = vmatpush1.bf16.msra.mxu0 %v459
        %508 = vmatprep.subr.bf16.mxu0 %v463
        %509 = vmatpush1.bf16.msra.mxu0 %v462
        %510 = vmatprep.subr.bf16.mxu0 %v466
        %511 = vmatpush1.bf16.msra.mxu0 %v465
        %512 = vmatprep.subr.bf16.mxu0 %v469
        %513 = vmatpush1.bf16.msra.mxu0 %v468
        %514 = vmatprep.subr.bf16.mxu0 %v472
        %515 = vmatpush1.bf16.msra.mxu0 %v471
        %516 = vmatprep.subr.bf16.mxu0 %v475
        %517 = vmatpush1.bf16.msra.mxu0 %v474
        %518 = vmatprep.subr.bf16.mxu0 %v478
        %519 = vmatpush1.bf16.msra.mxu0 %v477
        %520 = vmatprep.subr.bf16.mxu0 0
        %521 = vmatpush1.bf16.msra.mxu0 0
        %522 = vmatprep.subr.bf16.mxu0 0
        %523 = vmatpush1.bf16.msra.mxu0 0
        %524 = vmatprep.subr.bf16.mxu0 0
        %525 = vmatpush1.bf16.msra.mxu0 0
        %526 = vmatprep.subr.bf16.mxu0 0
        %527 = vmatpush1.bf16.msra.mxu0 0
        %528 = vmatprep.subr.bf16.mxu0 0
        %529 = vmatpush1.bf16.msra.mxu0 0
        %530 = vmatprep.subr.bf16.mxu0 0
        %531 = vmatpush1.bf16.msra.mxu0 0
        %532 = vmatprep.subr.bf16.mxu0 0
        %533 = vmatpush1.bf16.msra.mxu0 0
        %534 = vmatprep.subr.bf16.mxu0 0
        %535 = vmatpush1.bf16.msra.mxu0 0
        %536 = vmatprep.mubr.bf16.mxu0 0
        %537 = vmatmul.mubr.bf16.gmra.mrb[0].mxu0 %v319
        %v538 = vpop.f32.mrb[0].mxu0
        %v539 = vadd.f32 %v364, %v538
        %v540 = vpop.f32.mrb[0].mxu0
        %v541 = vadd.f32 %v368, %v540
        %v542 = vpop.f32.mrb[0].mxu0
        %v543 = vadd.f32 %v364, %v542
        %v544 = vpop.f32.mrb[0].mxu0
        %v545 = vadd.f32 %v368, %v544
        %546 = vmatprep.mubr.bf16.mxu0 0
        %547 = vmatmul.mubr.bf16.gmra.mrb[0].mxu0 %v320
        %v548 = vpop.f32.mrb[0].mxu0
        %v549 = vadd.f32 %v364, %v548
        %v550 = vpop.f32.mrb[0].mxu0
        %v551 = vadd.f32 %v368, %v550
        %v552 = vpop.f32.mrb[0].mxu0
        %v553 = vadd.f32 %v364, %v552
        %v554 = vpop.f32.mrb[0].mxu0
        %v555 = vadd.f32 %v368, %v554
        %556 = vmatprep.mubr.bf16.mxu0 0
        %557 = vmatmul.mubr.bf16.gmra.mrb[0].mxu0 %v321
        %v558 = vpop.f32.mrb[0].mxu0
        %v559 = vadd.f32 %v364, %v558
        %v560 = vpop.f32.mrb[0].mxu0
        %v561 = vadd.f32 %v368, %v560
        %v562 = vpop.f32.mrb[0].mxu0
        %v563 = vadd.f32 %v364, %v562
        %v564 = vpop.f32.mrb[0].mxu0
        %v565 = vadd.f32 %v368, %v564
        %566 = vmatprep.mubr.bf16.mxu0 0
        %567 = vmatmul.mubr.bf16.gmra.mrb[0].mxu0 %v322
        %v568 = vpop.f32.mrb[0].mxu0
        %v569 = vadd.f32 %v364, %v568
        %v570 = vpop.f32.mrb[0].mxu0
        %v571 = vadd.f32 %v368, %v570
        %v572 = vpop.f32.mrb[0].mxu0
        %v573 = vadd.f32 %v364, %v572
        %v574 = vpop.f32.mrb[0].mxu0
        %v575 = vadd.f32 %v368, %v574
        %576 = vmatprep.mubr.bf16.mxu0 0
        %577 = vmatmul.mubr.bf16.gmra.mrb[0].mxu0 %v323
        %v578 = vpop.f32.mrb[0].mxu0
        %v579 = vadd.f32 %v364, %v578
        %v580 = vpop.f32.mrb[0].mxu0
        %v581 = vadd.f32 %v368, %v580
        %v582 = vpop.f32.mrb[0].mxu0
        %v583 = vadd.f32 %v364, %v582
        %v584 = vpop.f32.mrb[0].mxu0
        %v585 = vadd.f32 %v368, %v584
        %586 = vmatprep.mubr.bf16.mxu0 0
        %587 = vmatmul.mubr.bf16.gmra.mrb[0].mxu0 %v324
        %v588 = vpop.f32.mrb[0].mxu0
        %v589 = vadd.f32 %v364, %v588
        %v590 = vpop.f32.mrb[0].mxu0
        %v591 = vadd.f32 %v368, %v590
        %v592 = vpop.f32.mrb[0].mxu0
        %v593 = vadd.f32 %v364, %v592
        %v594 = vpop.f32.mrb[0].mxu0
        %v595 = vadd.f32 %v368, %v594
        %596 = vmatprep.mubr.bf16.mxu0 0
        %597 = vmatmul.mubr.bf16.gmra.mrb[0].mxu0 %v325
        %v598 = vpop.f32.mrb[0].mxu0
        %v599 = vadd.f32 %v364, %v598
        %v600 = vpop.f32.mrb[0].mxu0
        %v601 = vadd.f32 %v368, %v600
        %v602 = vpop.f32.mrb[0].mxu0
        %v603 = vadd.f32 %v364, %v602
        %v604 = vpop.f32.mrb[0].mxu0
        %v605 = vadd.f32 %v368, %v604
        %606 = vmatprep.mubr.bf16.mxu0 0
        %607 = vmatmul.mubr.bf16.gmra.mrb[0].mxu0 %v326
        %v608 = vpop.f32.mrb[0].mxu0
        %v609 = vadd.f32 %v364, %v608
        %v610 = vpop.f32.mrb[0].mxu0
        %v611 = vadd.f32 %v368, %v610
        %v612 = vpop.f32.mrb[0].mxu0
        %v613 = vadd.f32 %v364, %v612
        %v614 = vpop.f32.mrb[0].mxu0
        %v615 = vadd.f32 %v368, %v614
        %616 = vdwg.mxu0
        %617 = vmatprep.subr.bf16.mxu0 0
        %618 = vmatpush1.bf16.msra.mxu0 %v458
        %619 = vmatprep.subr.bf16.mxu0 0
        %620 = vmatpush1.bf16.msra.mxu0 %v461
        %621 = vmatprep.subr.bf16.mxu0 0
        %622 = vmatpush1.bf16.msra.mxu0 %v464
        %623 = vmatprep.subr.bf16.mxu0 0
        %624 = vmatpush1.bf16.msra.mxu0 %v467
        %625 = vmatprep.subr.bf16.mxu0 0
        %626 = vmatpush1.bf16.msra.mxu0 %v470
        %627 = vmatprep.subr.bf16.mxu0 0
        %628 = vmatpush1.bf16.msra.mxu0 %v473
        %629 = vmatprep.subr.bf16.mxu0 0
        %630 = vmatpush1.bf16.msra.mxu0 %v476
        %631 = vmatprep.subr.bf16.mxu0 0
        %632 = vmatpush1.bf16.msra.mxu0 %v479
        %633 = vmatprep.subr.bf16.mxu0 0
        %634 = vmatpush1.bf16.msra.mxu0 0
        %635 = vmatprep.subr.bf16.mxu0 0
        %636 = vmatpush1.bf16.msra.mxu0 0
        %637 = vmatprep.subr.bf16.mxu0 0
        %638 = vmatpush1.bf16.msra.mxu0 0
        %639 = vmatprep.subr.bf16.mxu0 0
        %640 = vmatpush1.bf16.msra.mxu0 0
        %641 = vmatprep.subr.bf16.mxu0 0
        %642 = vmatpush1.bf16.msra.mxu0 0
        %643 = vmatprep.subr.bf16.mxu0 0
        %644 = vmatpush1.bf16.msra.mxu0 0
        %645 = vmatprep.subr.bf16.mxu0 0
        %646 = vmatpush1.bf16.msra.mxu0 0
        %647 = vmatprep.subr.bf16.mxu0 0
        %648 = vmatpush1.bf16.msra.mxu0 0
        %649 = vmatprep.mubr.bf16.mxu0 0
        %650 = vmatmul.mubr.bf16.gmra.mrb[0].mxu0 %v319
        %v651 = vpop.f32.mrb[0].mxu0
        %v652 = vadd.f32 %v372, %v651
        %v653 = vpop.f32.mrb[0].mxu0
        %v654 = vpop.f32.mrb[0].mxu0
        %v655 = vadd.f32 %v372, %v654
        %v656 = vpop.f32.mrb[0].mxu0
        %657 = vmatprep.mubr.bf16.mxu0 0
        %658 = vmatmul.mubr.bf16.gmra.mrb[0].mxu0 %v320
        %v659 = vpop.f32.mrb[0].mxu0
        %v660 = vadd.f32 %v372, %v659
        %v661 = vpop.f32.mrb[0].mxu0
        %v662 = vpop.f32.mrb[0].mxu0
        %v663 = vadd.f32 %v372, %v662
        %v664 = vpop.f32.mrb[0].mxu0
        %665 = vmatprep.mubr.bf16.mxu0 0
        %666 = vmatmul.mubr.bf16.gmra.mrb[0].mxu0 %v321
        %v667 = vpop.f32.mrb[0].mxu0
        %v668 = vadd.f32 %v372, %v667
        %v669 = vpop.f32.mrb[0].mxu0
        %v670 = vpop.f32.mrb[0].mxu0
        %v671 = vadd.f32 %v372, %v670
        %v672 = vpop.f32.mrb[0].mxu0
        %673 = vmatprep.mubr.bf16.mxu0 0
        %674 = vmatmul.mubr.bf16.gmra.mrb[0].mxu0 %v322
        %v675 = vpop.f32.mrb[0].mxu0
        %v676 = vadd.f32 %v372, %v675
        %v677 = vpop.f32.mrb[0].mxu0
        %v678 = vpop.f32.mrb[0].mxu0
        %v679 = vadd.f32 %v372, %v678
        %v680 = vpop.f32.mrb[0].mxu0
        %681 = vmatprep.mubr.bf16.mxu0 0
        %682 = vmatmul.mubr.bf16.gmra.mrb[0].mxu0 %v323
        %v683 = vpop.f32.mrb[0].mxu0
        %v684 = vadd.f32 %v372, %v683
        %v685 = vpop.f32.mrb[0].mxu0
        %v686 = vpop.f32.mrb[0].mxu0
        %v687 = vadd.f32 %v372, %v686
        %v688 = vpop.f32.mrb[0].mxu0
        %689 = vmatprep.mubr.bf16.mxu0 0
        %690 = vmatmul.mubr.bf16.gmra.mrb[0].mxu0 %v324
        %v691 = vpop.f32.mrb[0].mxu0
        %v692 = vadd.f32 %v372, %v691
        %v693 = vpop.f32.mrb[0].mxu0
        %v694 = vpop.f32.mrb[0].mxu0
        %v695 = vadd.f32 %v372, %v694
        %v696 = vpop.f32.mrb[0].mxu0
        %697 = vmatprep.mubr.bf16.mxu0 0
        %698 = vmatmul.mubr.bf16.gmra.mrb[0].mxu0 %v325
        %v699 = vpop.f32.mrb[0].mxu0
        %v700 = vadd.f32 %v372, %v699
        %v701 = vpop.f32.mrb[0].mxu0
        %v702 = vpop.f32.mrb[0].mxu0
        %v703 = vadd.f32 %v372, %v702
        %v704 = vpop.f32.mrb[0].mxu0
        %705 = vmatprep.mubr.bf16.mxu0 0
        %706 = vmatmul.mubr.bf16.gmra.mrb[0].mxu0 %v326
        %v707 = vpop.f32.mrb[0].mxu0
        %v708 = vadd.f32 %v372, %v707
        %v709 = vpop.f32.mrb[0].mxu0
        %v710 = vpop.f32.mrb[0].mxu0
        %v711 = vadd.f32 %v372, %v710
        %v712 = vpop.f32.mrb[0].mxu0
        %713 = vdwg.mxu0
        %v714 = vpack.c.bf16 %v543, %v539
        %v715 = vpack.c.bf16 %v553, %v549
        %v716 = vpack.c.bf16 %v563, %v559
        %v717 = vpack.c.bf16 %v573, %v569
        %v718 = vpack.c.bf16 %v583, %v579
        %v719 = vpack.c.bf16 %v593, %v589
        %v720 = vpack.c.bf16 %v603, %v599
        %v721 = vpack.c.bf16 %v613, %v609
        %v730 = vunpack.c.l.b16 %v714
        %v731 = vunpack.c.h.b16 %v714
        %v732 = vunpack.c.l.b16 %v715
        %v733 = vunpack.c.h.b16 %v715
        %v734 = vunpack.c.l.b16 %v716
        %v735 = vunpack.c.h.b16 %v716
        %v736 = vunpack.c.l.b16 %v717
        %v737 = vunpack.c.h.b16 %v717
        %v738 = vunpack.c.l.b16 %v718
        %v739 = vunpack.c.h.b16 %v718
        %v740 = vunpack.c.l.b16 %v719
        %v741 = vunpack.c.h.b16 %v719
        %v742 = vunpack.c.l.b16 %v720
        %v743 = vunpack.c.h.b16 %v720
        %v744 = vunpack.c.l.b16 %v721
        %v745 = vunpack.c.h.b16 %v721
        %v746 = vpack.c.b16 %v730, %v730
        %v747 = vpack.c.b16 %v731, %v731
        %v748 = vpack.c.b16 %v732, %v732
        %v749 = vpack.c.b16 %v733, %v733
        %v750 = vpack.c.b16 %v734, %v734
        %v751 = vpack.c.b16 %v735, %v735
        %v752 = vpack.c.b16 %v736, %v736
        %v753 = vpack.c.b16 %v737, %v737
        %v754 = vpack.c.b16 %v738, %v738
        %v755 = vpack.c.b16 %v739, %v739
        %v756 = vpack.c.b16 %v740, %v740
        %v757 = vpack.c.b16 %v741, %v741
        %v758 = vpack.c.b16 %v742, %v742
        %v759 = vpack.c.b16 %v743, %v743
        %v760 = vpack.c.b16 %v744, %v744
        %v761 = vpack.c.b16 %v745, %v745
        %778 = vst [vmem:[%s283] sm:$0xf] %v746
        %779 = vst [vmem:[%s283 + $0x4] sm:$0xf] %v747
        %780 = vst [vmem:[%s283 + $0x8] sm:$0xf] %v748
        %781 = vst [vmem:[%s283 + $0xc] sm:$0xf] %v749
        %782 = vst [vmem:[%s283 + $0x10] sm:$0xf] %v750
        %783 = vst [vmem:[%s283 + $0x14] sm:$0xf] %v751
        %784 = vst [vmem:[%s283 + $0x18] sm:$0xf] %v752
        %785 = vst [vmem:[%s283 + $0x1c] sm:$0xf] %v753
        %786 = vst [vmem:[%s283 + $0x20] sm:$0xf] %v754
        %787 = vst [vmem:[%s283 + $0x24] sm:$0xf] %v755
        %788 = vst [vmem:[%s283 + $0x28] sm:$0xf] %v756
        %789 = vst [vmem:[%s283 + $0x2c] sm:$0xf] %v757
        %790 = vst [vmem:[%s283 + $0x30] sm:$0xf] %v758
        %791 = vst [vmem:[%s283 + $0x34] sm:$0xf] %v759
        %792 = vst [vmem:[%s283 + $0x38] sm:$0xf] %v760
        %793 = vst [vmem:[%s283 + $0x3c] sm:$0xf] %v761
        %v794 = vpack.c.bf16 %v545, %v541
        %v795 = vpack.c.bf16 %v555, %v551
        %v796 = vpack.c.bf16 %v565, %v561
        %v797 = vpack.c.bf16 %v575, %v571
        %v798 = vpack.c.bf16 %v585, %v581
        %v799 = vpack.c.bf16 %v595, %v591
        %v800 = vpack.c.bf16 %v605, %v601
        %v801 = vpack.c.bf16 %v615, %v611
        %v810 = vunpack.c.l.b16 %v794
        %v811 = vunpack.c.h.b16 %v794
        %v812 = vunpack.c.l.b16 %v795
        %v813 = vunpack.c.h.b16 %v795
        %v814 = vunpack.c.l.b16 %v796
        %v815 = vunpack.c.h.b16 %v796
        %v816 = vunpack.c.l.b16 %v797
        %v817 = vunpack.c.h.b16 %v797
        %v818 = vunpack.c.l.b16 %v798
        %v819 = vunpack.c.h.b16 %v798
        %v820 = vunpack.c.l.b16 %v799
        %v821 = vunpack.c.h.b16 %v799
        %v822 = vunpack.c.l.b16 %v800
        %v823 = vunpack.c.h.b16 %v800
        %v824 = vunpack.c.l.b16 %v801
        %v825 = vunpack.c.h.b16 %v801
        %v826 = vpack.c.b16 %v810, %v810
        %v827 = vpack.c.b16 %v811, %v811
        %v828 = vpack.c.b16 %v812, %v812
        %v829 = vpack.c.b16 %v813, %v813
        %v830 = vpack.c.b16 %v814, %v814
        %v831 = vpack.c.b16 %v815, %v815
        %v832 = vpack.c.b16 %v816, %v816
        %v833 = vpack.c.b16 %v817, %v817
        %v834 = vpack.c.b16 %v818, %v818
        %v835 = vpack.c.b16 %v819, %v819
        %v836 = vpack.c.b16 %v820, %v820
        %v837 = vpack.c.b16 %v821, %v821
        %v838 = vpack.c.b16 %v822, %v822
        %v839 = vpack.c.b16 %v823, %v823
        %v840 = vpack.c.b16 %v824, %v824
        %v841 = vpack.c.b16 %v825, %v825
        %858 = vst [vmem:[%s290] sm:$0xf] %v826
        %859 = vst [vmem:[%s290 + $0x4] sm:$0xf] %v827
        %860 = vst [vmem:[%s290 + $0x8] sm:$0xf] %v828
        %861 = vst [vmem:[%s290 + $0xc] sm:$0xf] %v829
        %862 = vst [vmem:[%s290 + $0x10] sm:$0xf] %v830
        %863 = vst [vmem:[%s290 + $0x14] sm:$0xf] %v831
        %864 = vst [vmem:[%s290 + $0x18] sm:$0xf] %v832
        %865 = vst [vmem:[%s290 + $0x1c] sm:$0xf] %v833
        %866 = vst [vmem:[%s290 + $0x20] sm:$0xf] %v834
        %867 = vst [vmem:[%s290 + $0x24] sm:$0xf] %v835
        %868 = vst [vmem:[%s290 + $0x28] sm:$0xf] %v836
        %869 = vst [vmem:[%s290 + $0x2c] sm:$0xf] %v837
        %870 = vst [vmem:[%s290 + $0x30] sm:$0xf] %v838
        %871 = vst [vmem:[%s290 + $0x34] sm:$0xf] %v839
        %872 = vst [vmem:[%s290 + $0x38] sm:$0xf] %v840
        %873 = vst [vmem:[%s290 + $0x3c] sm:$0xf] %v841
        %v874 = vpack.c.bf16 %v655, %v652
        %v875 = vpack.c.bf16 %v663, %v660
        %v876 = vpack.c.bf16 %v671, %v668
        %v877 = vpack.c.bf16 %v679, %v676
        %v878 = vpack.c.bf16 %v687, %v684
        %v879 = vpack.c.bf16 %v695, %v692
        %v880 = vpack.c.bf16 %v703, %v700
        %v881 = vpack.c.bf16 %v711, %v708
        %v890 = vunpack.c.l.b16 %v874
        %v891 = vunpack.c.h.b16 %v874
        %v892 = vunpack.c.l.b16 %v875
        %v893 = vunpack.c.h.b16 %v875
        %v894 = vunpack.c.l.b16 %v876
        %v895 = vunpack.c.h.b16 %v876
        %v896 = vunpack.c.l.b16 %v877
        %v897 = vunpack.c.h.b16 %v877
        %v898 = vunpack.c.l.b16 %v878
        %v899 = vunpack.c.h.b16 %v878
        %v900 = vunpack.c.l.b16 %v879
        %v901 = vunpack.c.h.b16 %v879
        %v902 = vunpack.c.l.b16 %v880
        %v903 = vunpack.c.h.b16 %v880
        %v904 = vunpack.c.l.b16 %v881
        %v905 = vunpack.c.h.b16 %v881
        %v906 = vpack.c.b16 %v890, %v890
        %v907 = vpack.c.b16 %v891, %v891
        %v908 = vpack.c.b16 %v892, %v892
        %v909 = vpack.c.b16 %v893, %v893
        %v910 = vpack.c.b16 %v894, %v894
        %v911 = vpack.c.b16 %v895, %v895
        %v912 = vpack.c.b16 %v896, %v896
        %v913 = vpack.c.b16 %v897, %v897
        %v914 = vpack.c.b16 %v898, %v898
        %v915 = vpack.c.b16 %v899, %v899
        %v916 = vpack.c.b16 %v900, %v900
        %v917 = vpack.c.b16 %v901, %v901
        %v918 = vpack.c.b16 %v902, %v902
        %v919 = vpack.c.b16 %v903, %v903
        %v920 = vpack.c.b16 %v904, %v904
        %v921 = vpack.c.b16 %v905, %v905
        %938 = vst [vmem:[%s297] sm:$0xf] %v906
        %939 = vst [vmem:[%s297 + $0x4] sm:$0xf] %v907
        %940 = vst [vmem:[%s297 + $0x8] sm:$0xf] %v908
        %941 = vst [vmem:[%s297 + $0xc] sm:$0xf] %v909
        %942 = vst [vmem:[%s297 + $0x10] sm:$0xf] %v910
        %943 = vst [vmem:[%s297 + $0x14] sm:$0xf] %v911
        %944 = vst [vmem:[%s297 + $0x18] sm:$0xf] %v912
        %945 = vst [vmem:[%s297 + $0x1c] sm:$0xf] %v913
        %946 = vst [vmem:[%s297 + $0x20] sm:$0xf] %v914
        %947 = vst [vmem:[%s297 + $0x24] sm:$0xf] %v915
        %948 = vst [vmem:[%s297 + $0x28] sm:$0xf] %v916
        %949 = vst [vmem:[%s297 + $0x2c] sm:$0xf] %v917
        %950 = vst [vmem:[%s297 + $0x30] sm:$0xf] %v918
        %951 = vst [vmem:[%s297 + $0x34] sm:$0xf] %v919
        %952 = vst [vmem:[%s297 + $0x38] sm:$0xf] %v920
        %953 = vst [vmem:[%s297 + $0x3c] sm:$0xf] %v921
        %s954 = sand.u32 %s119, 1
        %s955 = scalar_lea.sflag [#allocation4], %s954
        %s956 = sand.u32 %s119, 1
        %s957 = smul.addr %s956, 64
        %s958 = scalar_lea.vmem [#allocation7], %s957
        %s959 = sand.u32 %s27, 1
        %s960 = scalar_lea.sflag [#allocation9], %s959
        %s961 = sand.u32 %s147, 1
        %s962 = smul.addr %s961, 64
        %s963 = scalar_lea.vmem [#allocation8], %s962
        %s964 = sand.u32 %s27, 1
        %s965 = scalar_lea.sflag [#allocation9], %s964
        %s966 = sand.u32 %s175, 1
        %s967 = smul.addr %s966, 64
        %s968 = scalar_lea.vmem [#allocation10], %s967
        // Predicated region
        $region41: #{tpu_custom_call.1} parent=31 // pred_check
          %p969 = pneg %p129
        $region42: #{tpu_custom_call.1} parent=31 // pred_check_branch
          %971 = sbr.rel (%p969) target = $region44
        $region43: #{tpu_custom_call.1} parent=31 // pred_region
          %s972 = smul.u32 16, %s32
          %s974 = ssub.s32 1024, 1024
          %975 = vsyncadd %s955, %s974
          %s976 = smul.addr %s31, 32
          %s977 = sadd.s32 %s972, %s976
          %s978 = smul.addr %s977, 64
          %s979 = scalar_lea.hbm %s3, %s978
          %s980 = sshll.u32 %s958, 4
          %s981 = int_to_ptr.vmem [resolvable:$true] %s980
          %986 = dma.vmem_to_hbm [thread:$0]  %s981, 1024, %s979, %s955, 64, 64, 4
        $region44: #{tpu_custom_call.1} parent=31 // pred_fallthru
          _
        // Predicated region
        $region45: #{tpu_custom_call.1} parent=31 // pred_check
          %p987 = pneg %p157
        $region46: #{tpu_custom_call.1} parent=31 // pred_check_branch
          %989 = sbr.rel (%p987) target = $region48
        $region47: #{tpu_custom_call.1} parent=31 // pred_region
          %s990 = smul.u32 16, %s32
          %s992 = ssub.s32 1024, 1024
          %993 = vsyncadd %s960, %s992
          %s994 = smul.addr %s31, 32
          %s995 = sadd.s32 %s990, %s994
          %s996 = smul.addr %s995, 64
          %s997 = scalar_lea.hbm %s4, %s996
          %s998 = sshll.u32 %s963, 4
          %s999 = int_to_ptr.vmem [resolvable:$true] %s998
          %1004 = dma.vmem_to_hbm [thread:$0]  %s999, 1024, %s997, %s960, 64, 64, 4
        $region48: #{tpu_custom_call.1} parent=31 // pred_fallthru
          _
        // Predicated region
        $region49: #{tpu_custom_call.1} parent=31 // pred_check
          %p1005 = pneg %p185
        $region50: #{tpu_custom_call.1} parent=31 // pred_check_branch
          %1007 = sbr.rel (%p1005) target = $region52
        $region51: #{tpu_custom_call.1} parent=31 // pred_region
          %s1008 = smul.u32 16, %s32
          %s1010 = ssub.s32 1024, 1024
          %1011 = vsyncadd %s965, %s1010
          %s1012 = smul.addr %s31, 32
          %s1013 = sadd.s32 %s1008, %s1012
          %s1014 = smul.addr %s1013, 64
          %s1015 = scalar_lea.hbm %s5, %s1014
          %s1016 = sshll.u32 %s968, 4
          %s1017 = int_to_ptr.vmem [resolvable:$true] %s1016
          %1022 = dma.vmem_to_hbm [thread:$0]  %s1017, 1024, %s1015, %s965, 64, 64, 4
        $region52: #{tpu_custom_call.1} parent=31 // pred_fallthru
          _
      $region32: #{tpu_custom_call.1} parent=5 // pred_fallthru
        _
      %p1023 = scmp.le.s32.totalorder 2, %s22
      // Predicated region
      $region53: #{tpu_custom_call.1} parent=5 // pred_check
        %p1024 = pneg %p1023
      $region54: #{tpu_custom_call.1} parent=5 // pred_check_branch
        %1026 = sbr.rel (%p1024) target = $region56
      $region55: #{tpu_custom_call.1} parent=5 // pred_region
        %s1027 = ssub.s32 %s22, 2
        // Predicated region
        $region57: #{tpu_custom_call.1} parent=55 // pred_check
          %p1028 = pneg %p135
        $region58: #{tpu_custom_call.1} parent=55 // pred_check_branch
          %1030 = sbr.rel (%p1028) target = $region60
        $region59: #{tpu_custom_call.1} parent=55 // pred_region
          %s1031 = sand.u32 %s120, 1
          %s1032 = scalar_lea.sflag [#allocation4], %s1031
          %s1033 = sand.u32 %s120, 1
          %s1034 = smul.addr %s1033, 64
          %s1035 = scalar_lea.vmem [#allocation7], %s1034
          %1036 = dma.done %s1032, 1024
        $region60: #{tpu_custom_call.1} parent=55 // pred_fallthru
          _
        // Predicated region
        $region61: #{tpu_custom_call.1} parent=55 // pred_check
          %p1037 = pneg %p163
        $region62: #{tpu_custom_call.1} parent=55 // pred_check_branch
          %1039 = sbr.rel (%p1037) target = $region64
        $region63: #{tpu_custom_call.1} parent=55 // pred_region
          %s1040 = sand.u32 %s28, 1
          %s1041 = scalar_lea.sflag [#allocation9], %s1040
          %s1042 = sand.u32 %s148, 1
          %s1043 = smul.addr %s1042, 64
          %s1044 = scalar_lea.vmem [#allocation8], %s1043
          %1045 = dma.done %s1041, 1024
        $region64: #{tpu_custom_call.1} parent=55 // pred_fallthru
          _
        // Predicated region
        $region65: #{tpu_custom_call.1} parent=55 // pred_check
          %p1046 = pneg %p191
        $region66: #{tpu_custom_call.1} parent=55 // pred_check_branch
          %1048 = sbr.rel (%p1046) target = $region68
        $region67: #{tpu_custom_call.1} parent=55 // pred_region
          %s1049 = sand.u32 %s28, 1
          %s1050 = scalar_lea.sflag [#allocation9], %s1049
          %s1051 = sand.u32 %s176, 1
          %s1052 = smul.addr %s1051, 64
          %s1053 = scalar_lea.vmem [#allocation10], %s1052
          %1054 = dma.done %s1050, 1024
        $region68: #{tpu_custom_call.1} parent=55 // pred_fallthru
          _
      $region56: #{tpu_custom_call.1} parent=5 // pred_fallthru
        _
    $region6: #{tpu_custom_call.1} parent=1 // loop_footer
      %s26 = sadd.s32 1, %s22
    $region7: #{tpu_custom_call.1} parent=1 // loop_footer_branch
      %21 = sbr.rel target = $region3
    $region8: #{tpu_custom_call.1} parent=1 // loop_exit
      _
    %1055 = vsyncpa [#allocation3], 1
    %s1056 = scalar_lea.sflag [#allocation3], 1
    %1057 = vsyncpa %s1056, 1
    %1058 = vsyncpa [#allocation6], 1
    %1059 = vsyncpa [#allocation4], 1
    %s1060 = scalar_lea.sflag [#allocation4], 1
    %1061 = vsyncpa %s1060, 1
    %1062 = vsyncpa [#allocation9], 1
    %s1063 = scalar_lea.sflag [#allocation9], 1
    %1064 = vsyncpa %s1063, 1

</llo_original>
